<compile_context>
chip_gen: v7x
topology: tpu7x:2x2x1
jax: 0.10.0
libtpu: 0.0.40
codegen_flags: <defaults>
</compile_context>

<pallas_src>
import jax
import jax.numpy as jnp
from jax import lax
from jax.experimental import pallas as pl
from jax.experimental.pallas import tpu as pltpu  # noqa: F401  (kept for TPU-specific extensions)

# Small, module-consistent shapes: seq, batch, d_model, nhead, dim_feedforward.
S, N, E, H, FF = 8, 2, 32, 4, 64
DH = E // H                       # head dim
NS = N * S                        # fused (seq*batch) rows, seq-major: row = s*N + n
EPS = 1e-5                        # PyTorch LayerNorm default


def encoder_layer_kernel(x_ref, winT_ref, woutT_ref, w1T_ref, w2T_ref, vec_ref, o_ref):
    """Single invocation: processes the whole fused (N*S, E) activation slab."""
    x = x_ref[...]                                                       # (NS, E)

    # Packed small parameters: one (8,128) slab -> slice rows (sublanes) at lane 0.
    vec = vec_ref[...]
    bin_ = vec[0:1, :3 * E]        # in_proj bias      (1, 3E)
    bout = vec[1:2, :E]            # out_proj bias     (1, E)
    b1   = vec[2:3, :FF]           # linear1 bias      (1, FF)
    b2   = vec[3:4, :E]            # linear2 bias      (1, E)
    g1   = vec[4:5, :E]            # norm1 weight
    bt1  = vec[5:6, :E]            # norm1 bias
    g2   = vec[6:7, :E]            # norm2 weight
    bt2  = vec[7:8, :E]            # norm2 bias

    # ---- fused QKV projection: one (NS,E)@(E,3E) MXU matmul (weights pre-transposed) ----
    qkv = jnp.dot(x, winT_ref[...], preferred_element_type=jnp.float32) + bin_
    scale = 1.0 / (DH ** 0.5)
    q = qkv[:, 0 * E:1 * E] * scale
    k = qkv[:, 1 * E:2 * E]
    v = qkv[:, 2 * E:3 * E]

    # Additive mask over the interleaved fused batch axis: row s*N+n may only attend
    # to keys with the same batch index, i.e. (row % N == col % N).
    rb = lax.broadcasted_iota(jnp.int32, (NS, NS), 0)
    cb = lax.broadcasted_iota(jnp.int32, (NS, NS), 1)
    neg = jnp.where((rb % N) == (cb % N), 0.0, -1e30).astype(jnp.float32)

    # ---- attention: heads statically unrolled, out-projection folded into the loop ----
    woutT = woutT_ref[...]                                               # (E, E)
    attn_proj = jnp.zeros((NS, E), jnp.float32)
    for h in range(H):
        lo = h * DH
        qh = q[:, lo:lo + DH]                                            # (NS, DH)
        kh = k[:, lo:lo + DH]
        vh = v[:, lo:lo + DH]
        # scores: contract the head dim directly — no in-kernel transpose of kh.
        s = lax.dot_general(qh, kh, (((1,), (1,)), ((), ())),
                            preferred_element_type=jnp.float32) + neg    # (NS, NS)
        s = s - jnp.max(s, axis=-1, keepdims=True)
        p = jnp.exp(s)
        rsum = jnp.sum(p, axis=-1, keepdims=True)
        # deferred softmax normalization on the small (NS,DH) PV output (EUP vrcp).
        oh = jnp.dot(p, vh, preferred_element_type=jnp.float32)
        oh = oh * pl.reciprocal(rsum, approx=True)
        # fold out-projection: accumulate oh @ WoutT[h*DH:(h+1)*DH, :]  (no lane concat)
        attn_proj = attn_proj + jnp.dot(oh, woutT[lo:lo + DH, :],
                                        preferred_element_type=jnp.float32)
    src2 = attn_proj + bout

    # ---- residual + LayerNorm1 ----
    y = x + src2
    mu = jnp.mean(y, axis=-1, keepdims=True)
    var = jnp.mean((y - mu) ** 2, axis=-1, keepdims=True)
    y = (y - mu) * lax.rsqrt(var + EPS) * g1 + bt1

    # ---- feed-forward (relu activation; dropout = identity in eval mode) ----
    h1 = jnp.dot(y, w1T_ref[...], preferred_element_type=jnp.float32) + b1
    h1 = jnp.maximum(h1, 0.0)
    z = jnp.dot(h1, w2T_ref[...], preferred_element_type=jnp.float32) + b2

    # ---- residual + LayerNorm2 ----
    y = y + z
    mu = jnp.mean(y, axis=-1, keepdims=True)
    var = jnp.mean((y - mu) ** 2, axis=-1, keepdims=True)
    o_ref[...] = (y - mu) * lax.rsqrt(var + EPS) * g2 + bt2


def _pack_row(v, width=128):
    v = jnp.asarray(v, jnp.float32).reshape(-1)
    return jnp.pad(v, (0, width - v.shape[0]))


def pack_params(params):
    """One-time (outside jit) parameter prep: transpose weights, pack small vectors."""
    win, bin_, wout, bout, w1, b1, w2, b2, g1, bt1, g2, bt2 = params
    vec = jnp.stack([_pack_row(bin_), _pack_row(bout), _pack_row(b1), _pack_row(b2),
                     _pack_row(g1), _pack_row(bt1), _pack_row(g2), _pack_row(bt2)])
    return (jnp.asarray(win.T, jnp.float32),     # (E, 3E)
            jnp.asarray(wout.T, jnp.float32),    # (E, E)
            jnp.asarray(w1.T, jnp.float32),      # (E, FF)
            jnp.asarray(w2.T, jnp.float32),      # (FF, E)
            vec)                                 # (8, 128)


@jax.jit
def encoder_layer(src, packed):
    """src: (S, N, E) float32 -> (S, N, E) float32 (eval-mode EncoderLayer forward)."""
    winT, woutT, w1T, w2T, vec = packed
    x2d = src.reshape(NS, E)                      # contiguous reshape, no transpose
    out2d = pl.pallas_call(
        encoder_layer_kernel,
        out_shape=jax.ShapeDtypeStruct((NS, E), jnp.float32),
    )(x2d, winT, woutT, w1T, w2T, vec)
    return out2d.reshape(S, N, E)                 # straight back, no transpose


def _reference(src, params):
    """Plain-JAX reference of the same math (eval-mode PyTorch EncoderLayer)."""
    win, bin_, wout, bout, w1, b1, w2, b2, g1, bt1, g2, bt2 = params

    def ln(x, g, b):
        mu = jnp.mean(x, axis=-1, keepdims=True)
        var = jnp.mean((x - mu) ** 2, axis=-1, keepdims=True)
        return (x - mu) * lax.rsqrt(var + EPS) * g + b

    x = jnp.transpose(src, (1, 0, 2))                        # (N, S, E)
    qkv = jnp.einsum('nse,fe->nsf', x, win) + bin_
    q, k, v = qkv[..., :E], qkv[..., E:2 * E], qkv[..., 2 * E:]
    q = q.reshape(N, S, H, DH).transpose(0, 2, 1, 3) / (DH ** 0.5)
    k = k.reshape(N, S, H, DH).transpose(0, 2, 1, 3)
    v = v.reshape(N, S, H, DH).transpose(0, 2, 1, 3)
    s = jnp.einsum('nhqd,nhkd->nhqk', q, k)
    p = jax.nn.softmax(s, axis=-1)
    o = jnp.einsum('nhqk,nhkd->nhqd', p, v).transpose(0, 2, 1, 3).reshape(N, S, E)
    src2 = jnp.einsum('nse,fe->nsf', o, wout) + bout
    y = ln(x + src2, g1, bt1)
    h1 = jnp.maximum(jnp.einsum('nse,fe->nsf', y, w1) + b1, 0.0)
    src2 = jnp.einsum('nsf,ef->nse', h1, w2) + b2
    y = ln(y + src2, g2, bt2)
    return jnp.transpose(y, (1, 0, 2))


def init_params(key):
    ks = jax.random.split(key, 8)
    win = 0.1 * jax.random.normal(ks[0], (3 * E, E), jnp.float32)   # in_proj_weight
    bin_ = 0.1 * jax.random.normal(ks[1], (1, 3 * E), jnp.float32)  # in_proj_bias
    wout = 0.1 * jax.random.normal(ks[2], (E, E), jnp.float32)      # out_proj.weight
    bout = 0.1 * jax.random.normal(ks[3], (1, E), jnp.float32)      # out_proj.bias
    w1 = 0.1 * jax.random.normal(ks[4], (FF, E), jnp.float32)       # linear1.weight
    b1 = 0.1 * jax.random.normal(ks[5], (1, FF), jnp.float32)       # linear1.bias
    w2 = 0.1 * jax.random.normal(ks[6], (E, FF), jnp.float32)       # linear2.weight
    b2 = 0.1 * jax.random.normal(ks[7], (1, E), jnp.float32)        # linear2.bias
    g1 = jnp.ones((1, E), jnp.float32); bt1 = jnp.zeros((1, E), jnp.float32)  # norm1
    g2 = jnp.ones((1, E), jnp.float32); bt2 = jnp.zeros((1, E), jnp.float32)  # norm2
    return (win, bin_, wout, bout, w1, b1, w2, b2, g1, bt1, g2, bt2)


if __name__ == "__main__":
    key = jax.random.PRNGKey(0)
    k_x, k_p = jax.random.split(key)
    src = jax.random.normal(k_x, (S, N, E), jnp.float32)   # (seq, batch, d_model)
    params = init_params(k_p)
    packed = pack_params(params)                           # one-time prep, outside jit

    out = encoder_layer(src, packed)
    out = jax.block_until_ready(out)

    ref = _reference(src, params)
    assert out.shape == (S, N, E)
    # tolerance loosened slightly for pl.reciprocal(approx=True) in softmax normalization
    assert jnp.allclose(out, ref, atol=2e-3, rtol=2e-3), "mismatch vs JAX reference"
    print("KERNEL_OK")
</pallas_src>

<mosaic_0001>
module attributes {stable_mosaic.version = 11 : i64} {
  func.func @encoder_layer_kernel(%arg0: memref<16x32xf32, #tpu.memory_space<vmem>>, %arg1: memref<32x96xf32, #tpu.memory_space<vmem>>, %arg2: memref<32x32xf32, #tpu.memory_space<vmem>>, %arg3: memref<32x64xf32, #tpu.memory_space<vmem>>, %arg4: memref<64x32xf32, #tpu.memory_space<vmem>>, %arg5: memref<8x128xf32, #tpu.memory_space<vmem>>, %arg6: memref<16x32xf32, #tpu.memory_space<vmem>>) attributes {dimension_semantics = [], scalar_prefetch = 0 : i64, scratch_operands = 0 : i64, tpu.core_type = #tpu.core_type<tc>} {
    %c0 = arith.constant 0 : index
    %c0_0 = arith.constant 0 : index
    %0 = vector.load %arg0[%c0, %c0_0] : memref<16x32xf32, #tpu.memory_space<vmem>>, vector<16x32xf32>
    %c0_1 = arith.constant 0 : index
    %c0_2 = arith.constant 0 : index
    %1 = vector.load %arg5[%c0_1, %c0_2] : memref<8x128xf32, #tpu.memory_space<vmem>>, vector<8x128xf32>
    %2 = vector.extract_strided_slice %1 {offsets = [0, 0], sizes = [1, 96], strides = [1, 1]} : vector<8x128xf32> to vector<1x96xf32>
    %3 = vector.extract_strided_slice %1 {offsets = [1, 0], sizes = [1, 32], strides = [1, 1]} : vector<8x128xf32> to vector<1x32xf32>
    %4 = vector.extract_strided_slice %1 {offsets = [2, 0], sizes = [1, 64], strides = [1, 1]} : vector<8x128xf32> to vector<1x64xf32>
    %5 = vector.extract_strided_slice %1 {offsets = [3, 0], sizes = [1, 32], strides = [1, 1]} : vector<8x128xf32> to vector<1x32xf32>
    %6 = vector.extract_strided_slice %1 {offsets = [4, 0], sizes = [1, 32], strides = [1, 1]} : vector<8x128xf32> to vector<1x32xf32>
    %7 = vector.extract_strided_slice %1 {offsets = [5, 0], sizes = [1, 32], strides = [1, 1]} : vector<8x128xf32> to vector<1x32xf32>
    %8 = vector.extract_strided_slice %1 {offsets = [6, 0], sizes = [1, 32], strides = [1, 1]} : vector<8x128xf32> to vector<1x32xf32>
    %9 = vector.extract_strided_slice %1 {offsets = [7, 0], sizes = [1, 32], strides = [1, 1]} : vector<8x128xf32> to vector<1x32xf32>
    %c0_3 = arith.constant 0 : index
    %c0_4 = arith.constant 0 : index
    %10 = vector.load %arg1[%c0_3, %c0_4] : memref<32x96xf32, #tpu.memory_space<vmem>>, vector<32x96xf32>
    %cst = arith.constant dense<0.000000e+00> : vector<16x96xf32>
    %11 = tpu.matmul %0, %10, %cst {dimension_numbers = #tpu.dot_dimension_numbers<[1], [0], [0], [1], [0, 0, 1, 1], [], []>} : vector<16x32xf32>, vector<32x96xf32>, vector<16x96xf32> -> vector<16x96xf32>
    %12 = vector.broadcast %2 : vector<1x96xf32> to vector<16x96xf32>
    %13 = arith.addf %11, %12 : vector<16x96xf32>
    %14 = vector.extract_strided_slice %13 {offsets = [0, 0], sizes = [16, 32], strides = [1, 1]} : vector<16x96xf32> to vector<16x32xf32>
    %cst_5 = arith.constant 0.353553385 : f32
    %15 = vector.broadcast %cst_5 : f32 to vector<16x32xf32>
    %16 = arith.mulf %14, %15 : vector<16x32xf32>
    %17 = vector.extract_strided_slice %13 {offsets = [0, 32], sizes = [16, 32], strides = [1, 1]} : vector<16x96xf32> to vector<16x32xf32>
    %18 = vector.extract_strided_slice %13 {offsets = [0, 64], sizes = [16, 32], strides = [1, 1]} : vector<16x96xf32> to vector<16x32xf32>
    %19 = tpu.iota {dimensions = array<i32: 0>} : vector<16x16xi32>
    %20 = tpu.iota {dimensions = array<i32: 1>} : vector<16x16xi32>
    %c2_i32 = arith.constant 2 : i32
    %c0_i32 = arith.constant 0 : i32
    %21 = arith.cmpi eq, %c2_i32, %c0_i32 : i32
    %c1_i32 = arith.constant 1 : i32
    %22 = arith.select %21, %c1_i32, %c2_i32 : i32
    %23 = vector.broadcast %22 : i32 to vector<16x16xi32>
    %24 = arith.remsi %19, %23 : vector<16x16xi32>
    %c0_i32_6 = arith.constant 0 : i32
    %25 = vector.broadcast %c0_i32_6 : i32 to vector<16x16xi32>
    %26 = arith.cmpi ne, %24, %25 : vector<16x16xi32>
    %c0_i32_7 = arith.constant 0 : i32
    %27 = vector.broadcast %c0_i32_7 : i32 to vector<16x16xi32>
    %28 = arith.cmpi slt, %24, %27 : vector<16x16xi32>
    %c0_i32_8 = arith.constant 0 : i32
    %29 = arith.cmpi slt, %22, %c0_i32_8 : i32
    %30 = vector.broadcast %29 : i1 to vector<16x16xi1>
    %31 = vector.broadcast %30 : vector<16x16xi1> to vector<16x16xi1>
    %32 = arith.xori %28, %31 : vector<16x16xi1>
    %33 = arith.andi %32, %26 : vector<16x16xi1>
    %34 = vector.broadcast %22 : i32 to vector<16x16xi32>
    %35 = arith.addi %24, %34 : vector<16x16xi32>
    %36 = arith.select %33, %35, %24 : vector<16x16xi1>, vector<16x16xi32>
    %c2_i32_9 = arith.constant 2 : i32
    %c0_i32_10 = arith.constant 0 : i32
    %37 = arith.cmpi eq, %c2_i32_9, %c0_i32_10 : i32
    %c1_i32_11 = arith.constant 1 : i32
    %38 = arith.select %37, %c1_i32_11, %c2_i32_9 : i32
    %39 = vector.broadcast %38 : i32 to vector<16x16xi32>
    %40 = arith.remsi %20, %39 : vector<16x16xi32>
    %c0_i32_12 = arith.constant 0 : i32
    %41 = vector.broadcast %c0_i32_12 : i32 to vector<16x16xi32>
    %42 = arith.cmpi ne, %40, %41 : vector<16x16xi32>
    %c0_i32_13 = arith.constant 0 : i32
    %43 = vector.broadcast %c0_i32_13 : i32 to vector<16x16xi32>
    %44 = arith.cmpi slt, %40, %43 : vector<16x16xi32>
    %c0_i32_14 = arith.constant 0 : i32
    %45 = arith.cmpi slt, %38, %c0_i32_14 : i32
    %46 = vector.broadcast %45 : i1 to vector<16x16xi1>
    %47 = vector.broadcast %46 : vector<16x16xi1> to vector<16x16xi1>
    %48 = arith.xori %44, %47 : vector<16x16xi1>
    %49 = arith.andi %48, %42 : vector<16x16xi1>
    %50 = vector.broadcast %38 : i32 to vector<16x16xi32>
    %51 = arith.addi %40, %50 : vector<16x16xi32>
    %52 = arith.select %49, %51, %40 : vector<16x16xi1>, vector<16x16xi32>
    %53 = arith.cmpi eq, %36, %52 : vector<16x16xi32>
    %cst_15 = arith.constant 0.000000e+00 : f32
    %cst_16 = arith.constant -1.000000e+30 : f32
    %54 = vector.broadcast %cst_15 : f32 to vector<16x16xf32>
    %55 = vector.broadcast %cst_16 : f32 to vector<16x16xf32>
    %56 = arith.select %53, %54, %55 : vector<16x16xi1>, vector<16x16xf32>
    %c0_17 = arith.constant 0 : index
    %c0_18 = arith.constant 0 : index
    %57 = vector.load %arg2[%c0_17, %c0_18] : memref<32x32xf32, #tpu.memory_space<vmem>>, vector<32x32xf32>
    %cst_19 = arith.constant 0.000000e+00 : f32
    %58 = vector.broadcast %cst_19 : f32 to vector<16x32xf32>
    %59 = vector.extract_strided_slice %16 {offsets = [0, 0], sizes = [16, 8], strides = [1, 1]} : vector<16x32xf32> to vector<16x8xf32>
    %60 = vector.extract_strided_slice %17 {offsets = [0, 0], sizes = [16, 8], strides = [1, 1]} : vector<16x32xf32> to vector<16x8xf32>
    %61 = vector.extract_strided_slice %18 {offsets = [0, 0], sizes = [16, 8], strides = [1, 1]} : vector<16x32xf32> to vector<16x8xf32>
    %cst_20 = arith.constant dense<0.000000e+00> : vector<16x16xf32>
    %62 = tpu.matmul %59, %60, %cst_20 {dimension_numbers = #tpu.dot_dimension_numbers<[1], [1], [0], [0], [0, 0, 1, 0], [], []>} : vector<16x8xf32>, vector<16x8xf32>, vector<16x16xf32> -> vector<16x16xf32>
    %63 = arith.addf %62, %56 : vector<16x16xf32>
    %cst_21 = arith.constant dense<0xFF800000> : vector<16xf32>
    %64 = vector.multi_reduction <maximumf>, %63, %cst_21 [1] : vector<16x16xf32> to vector<16xf32>
    %65 = vector.shape_cast %64 : vector<16xf32> to vector<16x1xf32>
    %66 = vector.broadcast %65 : vector<16x1xf32> to vector<16x16xf32>
    %67 = arith.subf %63, %66 : vector<16x16xf32>
    %68 = math.exp %67 : vector<16x16xf32>
    %cst_22 = arith.constant dense<0.000000e+00> : vector<16xf32>
    %69 = vector.multi_reduction <add>, %68, %cst_22 [1] : vector<16x16xf32> to vector<16xf32>
    %70 = vector.shape_cast %69 : vector<16xf32> to vector<16x1xf32>
    %cst_23 = arith.constant dense<0.000000e+00> : vector<16x8xf32>
    %71 = tpu.matmul %68, %61, %cst_23 {dimension_numbers = #tpu.dot_dimension_numbers<[1], [0], [0], [1], [0, 0, 1, 1], [], []>} : vector<16x16xf32>, vector<16x8xf32>, vector<16x8xf32> -> vector<16x8xf32>
    %72 = tpu.reciprocal %70 {approx = true} : vector<16x1xf32> -> vector<16x1xf32>
    %73 = vector.broadcast %72 : vector<16x1xf32> to vector<16x8xf32>
    %74 = arith.mulf %71, %73 : vector<16x8xf32>
    %75 = vector.extract_strided_slice %57 {offsets = [0, 0], sizes = [8, 32], strides = [1, 1]} : vector<32x32xf32> to vector<8x32xf32>
    %cst_24 = arith.constant dense<0.000000e+00> : vector<16x32xf32>
    %76 = tpu.matmul %74, %75, %cst_24 {dimension_numbers = #tpu.dot_dimension_numbers<[1], [0], [0], [1], [0, 0, 1, 1], [], []>} : vector<16x8xf32>, vector<8x32xf32>, vector<16x32xf32> -> vector<16x32xf32>
    %77 = arith.addf %58, %76 : vector<16x32xf32>
    %78 = vector.extract_strided_slice %16 {offsets = [0, 8], sizes = [16, 8], strides = [1, 1]} : vector<16x32xf32> to vector<16x8xf32>
    %79 = vector.extract_strided_slice %17 {offsets = [0, 8], sizes = [16, 8], strides = [1, 1]} : vector<16x32xf32> to vector<16x8xf32>
    %80 = vector.extract_strided_slice %18 {offsets = [0, 8], sizes = [16, 8], strides = [1, 1]} : vector<16x32xf32> to vector<16x8xf32>
    %cst_25 = arith.constant dense<0.000000e+00> : vector<16x16xf32>
    %81 = tpu.matmul %78, %79, %cst_25 {dimension_numbers = #tpu.dot_dimension_numbers<[1], [1], [0], [0], [0, 0, 1, 0], [], []>} : vector<16x8xf32>, vector<16x8xf32>, vector<16x16xf32> -> vector<16x16xf32>
    %82 = arith.addf %81, %56 : vector<16x16xf32>
    %cst_26 = arith.constant dense<0xFF800000> : vector<16xf32>
    %83 = vector.multi_reduction <maximumf>, %82, %cst_26 [1] : vector<16x16xf32> to vector<16xf32>
    %84 = vector.shape_cast %83 : vector<16xf32> to vector<16x1xf32>
    %85 = vector.broadcast %84 : vector<16x1xf32> to vector<16x16xf32>
    %86 = arith.subf %82, %85 : vector<16x16xf32>
    %87 = math.exp %86 : vector<16x16xf32>
    %cst_27 = arith.constant dense<0.000000e+00> : vector<16xf32>
    %88 = vector.multi_reduction <add>, %87, %cst_27 [1] : vector<16x16xf32> to vector<16xf32>
    %89 = vector.shape_cast %88 : vector<16xf32> to vector<16x1xf32>
    %cst_28 = arith.constant dense<0.000000e+00> : vector<16x8xf32>
    %90 = tpu.matmul %87, %80, %cst_28 {dimension_numbers = #tpu.dot_dimension_numbers<[1], [0], [0], [1], [0, 0, 1, 1], [], []>} : vector<16x16xf32>, vector<16x8xf32>, vector<16x8xf32> -> vector<16x8xf32>
    %91 = tpu.reciprocal %89 {approx = true} : vector<16x1xf32> -> vector<16x1xf32>
    %92 = vector.broadcast %91 : vector<16x1xf32> to vector<16x8xf32>
    %93 = arith.mulf %90, %92 : vector<16x8xf32>
    %94 = vector.extract_strided_slice %57 {offsets = [8, 0], sizes = [8, 32], strides = [1, 1]} : vector<32x32xf32> to vector<8x32xf32>
    %cst_29 = arith.constant dense<0.000000e+00> : vector<16x32xf32>
    %95 = tpu.matmul %93, %94, %cst_29 {dimension_numbers = #tpu.dot_dimension_numbers<[1], [0], [0], [1], [0, 0, 1, 1], [], []>} : vector<16x8xf32>, vector<8x32xf32>, vector<16x32xf32> -> vector<16x32xf32>
    %96 = arith.addf %77, %95 : vector<16x32xf32>
    %97 = vector.extract_strided_slice %16 {offsets = [0, 16], sizes = [16, 8], strides = [1, 1]} : vector<16x32xf32> to vector<16x8xf32>
    %98 = vector.extract_strided_slice %17 {offsets = [0, 16], sizes = [16, 8], strides = [1, 1]} : vector<16x32xf32> to vector<16x8xf32>
    %99 = vector.extract_strided_slice %18 {offsets = [0, 16], sizes = [16, 8], strides = [1, 1]} : vector<16x32xf32> to vector<16x8xf32>
    %cst_30 = arith.constant dense<0.000000e+00> : vector<16x16xf32>
    %100 = tpu.matmul %97, %98, %cst_30 {dimension_numbers = #tpu.dot_dimension_numbers<[1], [1], [0], [0], [0, 0, 1, 0], [], []>} : vector<16x8xf32>, vector<16x8xf32>, vector<16x16xf32> -> vector<16x16xf32>
    %101 = arith.addf %100, %56 : vector<16x16xf32>
    %cst_31 = arith.constant dense<0xFF800000> : vector<16xf32>
    %102 = vector.multi_reduction <maximumf>, %101, %cst_31 [1] : vector<16x16xf32> to vector<16xf32>
    %103 = vector.shape_cast %102 : vector<16xf32> to vector<16x1xf32>
    %104 = vector.broadcast %103 : vector<16x1xf32> to vector<16x16xf32>
    %105 = arith.subf %101, %104 : vector<16x16xf32>
    %106 = math.exp %105 : vector<16x16xf32>
    %cst_32 = arith.constant dense<0.000000e+00> : vector<16xf32>
    %107 = vector.multi_reduction <add>, %106, %cst_32 [1] : vector<16x16xf32> to vector<16xf32>
    %108 = vector.shape_cast %107 : vector<16xf32> to vector<16x1xf32>
    %cst_33 = arith.constant dense<0.000000e+00> : vector<16x8xf32>
    %109 = tpu.matmul %106, %99, %cst_33 {dimension_numbers = #tpu.dot_dimension_numbers<[1], [0], [0], [1], [0, 0, 1, 1], [], []>} : vector<16x16xf32>, vector<16x8xf32>, vector<16x8xf32> -> vector<16x8xf32>
    %110 = tpu.reciprocal %108 {approx = true} : vector<16x1xf32> -> vector<16x1xf32>
    %111 = vector.broadcast %110 : vector<16x1xf32> to vector<16x8xf32>
    %112 = arith.mulf %109, %111 : vector<16x8xf32>
    %113 = vector.extract_strided_slice %57 {offsets = [16, 0], sizes = [8, 32], strides = [1, 1]} : vector<32x32xf32> to vector<8x32xf32>
    %cst_34 = arith.constant dense<0.000000e+00> : vector<16x32xf32>
    %114 = tpu.matmul %112, %113, %cst_34 {dimension_numbers = #tpu.dot_dimension_numbers<[1], [0], [0], [1], [0, 0, 1, 1], [], []>} : vector<16x8xf32>, vector<8x32xf32>, vector<16x32xf32> -> vector<16x32xf32>
    %115 = arith.addf %96, %114 : vector<16x32xf32>
    %116 = vector.extract_strided_slice %16 {offsets = [0, 24], sizes = [16, 8], strides = [1, 1]} : vector<16x32xf32> to vector<16x8xf32>
    %117 = vector.extract_strided_slice %17 {offsets = [0, 24], sizes = [16, 8], strides = [1, 1]} : vector<16x32xf32> to vector<16x8xf32>
    %118 = vector.extract_strided_slice %18 {offsets = [0, 24], sizes = [16, 8], strides = [1, 1]} : vector<16x32xf32> to vector<16x8xf32>
    %cst_35 = arith.constant dense<0.000000e+00> : vector<16x16xf32>
    %119 = tpu.matmul %116, %117, %cst_35 {dimension_numbers = #tpu.dot_dimension_numbers<[1], [1], [0], [0], [0, 0, 1, 0], [], []>} : vector<16x8xf32>, vector<16x8xf32>, vector<16x16xf32> -> vector<16x16xf32>
    %120 = arith.addf %119, %56 : vector<16x16xf32>
    %cst_36 = arith.constant dense<0xFF800000> : vector<16xf32>
    %121 = vector.multi_reduction <maximumf>, %120, %cst_36 [1] : vector<16x16xf32> to vector<16xf32>
    %122 = vector.shape_cast %121 : vector<16xf32> to vector<16x1xf32>
    %123 = vector.broadcast %122 : vector<16x1xf32> to vector<16x16xf32>
    %124 = arith.subf %120, %123 : vector<16x16xf32>
    %125 = math.exp %124 : vector<16x16xf32>
    %cst_37 = arith.constant dense<0.000000e+00> : vector<16xf32>
    %126 = vector.multi_reduction <add>, %125, %cst_37 [1] : vector<16x16xf32> to vector<16xf32>
    %127 = vector.shape_cast %126 : vector<16xf32> to vector<16x1xf32>
    %cst_38 = arith.constant dense<0.000000e+00> : vector<16x8xf32>
    %128 = tpu.matmul %125, %118, %cst_38 {dimension_numbers = #tpu.dot_dimension_numbers<[1], [0], [0], [1], [0, 0, 1, 1], [], []>} : vector<16x16xf32>, vector<16x8xf32>, vector<16x8xf32> -> vector<16x8xf32>
    %129 = tpu.reciprocal %127 {approx = true} : vector<16x1xf32> -> vector<16x1xf32>
    %130 = vector.broadcast %129 : vector<16x1xf32> to vector<16x8xf32>
    %131 = arith.mulf %128, %130 : vector<16x8xf32>
    %132 = vector.extract_strided_slice %57 {offsets = [24, 0], sizes = [8, 32], strides = [1, 1]} : vector<32x32xf32> to vector<8x32xf32>
    %cst_39 = arith.constant dense<0.000000e+00> : vector<16x32xf32>
    %133 = tpu.matmul %131, %132, %cst_39 {dimension_numbers = #tpu.dot_dimension_numbers<[1], [0], [0], [1], [0, 0, 1, 1], [], []>} : vector<16x8xf32>, vector<8x32xf32>, vector<16x32xf32> -> vector<16x32xf32>
    %134 = arith.addf %115, %133 : vector<16x32xf32>
    %135 = vector.broadcast %3 : vector<1x32xf32> to vector<16x32xf32>
    %136 = arith.addf %134, %135 : vector<16x32xf32>
    %137 = arith.addf %0, %136 : vector<16x32xf32>
    %cst_40 = arith.constant dense<0.000000e+00> : vector<16xf32>
    %138 = vector.multi_reduction <add>, %137, %cst_40 [1] : vector<16x32xf32> to vector<16xf32>
    %139 = vector.shape_cast %138 : vector<16xf32> to vector<16x1xf32>
    %cst_41 = arith.constant 3.200000e+01 : f32
    %140 = vector.broadcast %cst_41 : f32 to vector<16x1xf32>
    %141 = arith.divf %139, %140 : vector<16x1xf32>
    %142 = vector.broadcast %141 : vector<16x1xf32> to vector<16x32xf32>
    %143 = arith.subf %137, %142 : vector<16x32xf32>
    %144 = arith.mulf %143, %143 : vector<16x32xf32>
    %cst_42 = arith.constant dense<0.000000e+00> : vector<16xf32>
    %145 = vector.multi_reduction <add>, %144, %cst_42 [1] : vector<16x32xf32> to vector<16xf32>
    %146 = vector.shape_cast %145 : vector<16xf32> to vector<16x1xf32>
    %cst_43 = arith.constant 3.200000e+01 : f32
    %147 = vector.broadcast %cst_43 : f32 to vector<16x1xf32>
    %148 = arith.divf %146, %147 : vector<16x1xf32>
    %149 = vector.broadcast %141 : vector<16x1xf32> to vector<16x32xf32>
    %150 = arith.subf %137, %149 : vector<16x32xf32>
    %cst_44 = arith.constant 9.99999974E-6 : f32
    %151 = vector.broadcast %cst_44 : f32 to vector<16x1xf32>
    %152 = arith.addf %148, %151 : vector<16x1xf32>
    %153 = math.rsqrt %152 : vector<16x1xf32>
    %154 = vector.broadcast %153 : vector<16x1xf32> to vector<16x32xf32>
    %155 = arith.mulf %150, %154 : vector<16x32xf32>
    %156 = vector.broadcast %6 : vector<1x32xf32> to vector<16x32xf32>
    %157 = arith.mulf %155, %156 : vector<16x32xf32>
    %158 = vector.broadcast %7 : vector<1x32xf32> to vector<16x32xf32>
    %159 = arith.addf %157, %158 : vector<16x32xf32>
    %c0_45 = arith.constant 0 : index
    %c0_46 = arith.constant 0 : index
    %160 = vector.load %arg3[%c0_45, %c0_46] : memref<32x64xf32, #tpu.memory_space<vmem>>, vector<32x64xf32>
    %cst_47 = arith.constant dense<0.000000e+00> : vector<16x64xf32>
    %161 = tpu.matmul %159, %160, %cst_47 {dimension_numbers = #tpu.dot_dimension_numbers<[1], [0], [0], [1], [0, 0, 1, 1], [], []>} : vector<16x32xf32>, vector<32x64xf32>, vector<16x64xf32> -> vector<16x64xf32>
    %162 = vector.broadcast %4 : vector<1x64xf32> to vector<16x64xf32>
    %163 = arith.addf %161, %162 : vector<16x64xf32>
    %cst_48 = arith.constant 0.000000e+00 : f32
    %164 = vector.broadcast %cst_48 : f32 to vector<16x64xf32>
    %165 = arith.maximumf %163, %164 : vector<16x64xf32>
    %c0_49 = arith.constant 0 : index
    %c0_50 = arith.constant 0 : index
    %166 = vector.load %arg4[%c0_49, %c0_50] : memref<64x32xf32, #tpu.memory_space<vmem>>, vector<64x32xf32>
    %cst_51 = arith.constant dense<0.000000e+00> : vector<16x32xf32>
    %167 = tpu.matmul %165, %166, %cst_51 {dimension_numbers = #tpu.dot_dimension_numbers<[1], [0], [0], [1], [0, 0, 1, 1], [], []>} : vector<16x64xf32>, vector<64x32xf32>, vector<16x32xf32> -> vector<16x32xf32>
    %168 = vector.broadcast %5 : vector<1x32xf32> to vector<16x32xf32>
    %169 = arith.addf %167, %168 : vector<16x32xf32>
    %170 = arith.addf %159, %169 : vector<16x32xf32>
    %cst_52 = arith.constant dense<0.000000e+00> : vector<16xf32>
    %171 = vector.multi_reduction <add>, %170, %cst_52 [1] : vector<16x32xf32> to vector<16xf32>
    %172 = vector.shape_cast %171 : vector<16xf32> to vector<16x1xf32>
    %cst_53 = arith.constant 3.200000e+01 : f32
    %173 = vector.broadcast %cst_53 : f32 to vector<16x1xf32>
    %174 = arith.divf %172, %173 : vector<16x1xf32>
    %175 = vector.broadcast %174 : vector<16x1xf32> to vector<16x32xf32>
    %176 = arith.subf %170, %175 : vector<16x32xf32>
    %177 = arith.mulf %176, %176 : vector<16x32xf32>
    %cst_54 = arith.constant dense<0.000000e+00> : vector<16xf32>
    %178 = vector.multi_reduction <add>, %177, %cst_54 [1] : vector<16x32xf32> to vector<16xf32>
    %179 = vector.shape_cast %178 : vector<16xf32> to vector<16x1xf32>
    %cst_55 = arith.constant 3.200000e+01 : f32
    %180 = vector.broadcast %cst_55 : f32 to vector<16x1xf32>
    %181 = arith.divf %179, %180 : vector<16x1xf32>
    %182 = vector.broadcast %174 : vector<16x1xf32> to vector<16x32xf32>
    %183 = arith.subf %170, %182 : vector<16x32xf32>
    %cst_56 = arith.constant 9.99999974E-6 : f32
    %184 = vector.broadcast %cst_56 : f32 to vector<16x1xf32>
    %185 = arith.addf %181, %184 : vector<16x1xf32>
    %186 = math.rsqrt %185 : vector<16x1xf32>
    %187 = vector.broadcast %186 : vector<16x1xf32> to vector<16x32xf32>
    %188 = arith.mulf %183, %187 : vector<16x32xf32>
    %189 = vector.broadcast %8 : vector<1x32xf32> to vector<16x32xf32>
    %190 = arith.mulf %188, %189 : vector<16x32xf32>
    %191 = vector.broadcast %9 : vector<1x32xf32> to vector<16x32xf32>
    %192 = arith.addf %190, %191 : vector<16x32xf32>
    %c0_57 = arith.constant 0 : index
    %c0_58 = arith.constant 0 : index
    %193 = vector.load %arg6[%c0_57, %c0_58] : memref<16x32xf32, #tpu.memory_space<vmem>>, vector<16x32xf32>
    tpu.vector_store %arg6[%c0_57, %c0_58], %192 {strides = array<i32>} : memref<16x32xf32, #tpu.memory_space<vmem>>, vector<16x32xf32>,
    return
  }
}

</mosaic_0001>

<llo_original>
// kernel: encoder_layer.1
$region0: #{encoder_layer.1}
  #allocation0 [shape = 'u32[]', space=smem, size = 0x4, offset = 0x4, fixed_abs, tag = 'smem constant byte address 0x4 - core index']
  #allocation1 [shape = 'u32[144,128]{1,0:T(1,128)}', space=vmem, size = 0x12000, scoped, tag = 'internal scratch']
  %s0 = inlined_call_operand.hbm [shape: f32[16,32], index: 0, kind: input, shape index: {}]
  %s1 = inlined_call_operand.vmem [shape: f32[32,96], index: 1, kind: input, shape index: {}]
  %s2 = inlined_call_operand.vmem [shape: f32[32,32], index: 2, kind: input, shape index: {}]
  %s3 = inlined_call_operand.vmem [shape: f32[32,64], index: 3, kind: input, shape index: {}]
  %s4 = inlined_call_operand.vmem [shape: f32[64,32], index: 4, kind: input, shape index: {}]
  %s5 = inlined_call_operand.vmem [shape: f32[8,128], index: 5, kind: input, shape index: {}]
  %s6 = inlined_call_operand.hbm [shape: f32[16,32], index: 6, kind: output, shape index: {}]
  %s7 = sld [smem:[#allocation0]]
  $region38: #{encoder_layer.1} parent=0
    _
  %s9 = ssub.s32 1, %s7
  %s10 = scalar_select 0, %s9, %s7
  $region1: #{encoder_layer.1} parent=0
    #allocation2 [shape = 'u8[8192]{0}', space=vmem, size = 0x2000, scoped, tag = 'input window, operand 0, single buffered']
    #allocation3 [shape = 's32[1]{0}', space=sflag, size = 0x4, scoped, tag = 'scoped memory for encoder_layer.1']
    #allocation4 [shape = 's32[1]{0}', space=sflag, size = 0x4, scoped, tag = 'scoped memory for encoder_layer.1']
    #allocation5 [shape = 'u8[8192]{0}', space=vmem, size = 0x2000, scoped, tag = 'output window, operand 0, single buffered']
    %11 = vsyncpa [#allocation3], 0
    %12 = vsyncpa [#allocation4], 0
    // Predicated region
    $region2: #{encoder_layer.1} parent=1 // pred_check
      _
    $region3: #{encoder_layer.1} parent=1 // pred_check_branch
      %14 = sbr.rel (0) target = $region5
    $region4: #{encoder_layer.1} parent=1 // pred_region
      %s16 = ssub.s32 256, 256
      %17 = vsyncadd [#allocation3], %s16
      %s18 = sshll.u32 [#allocation2], 4
      %s19 = int_to_ptr.vmem [resolvable:$true] %s18
      %24 = dma.hbm_to_vmem [thread:$0]  %s0, 256, %s19, [#allocation3], 128, 128, 8
    $region5: #{encoder_layer.1} parent=1 // pred_fallthru
      _
    // Predicated region
    $region6: #{encoder_layer.1} parent=1 // pred_check
      _
    $region7: #{encoder_layer.1} parent=1 // pred_check_branch
      %26 = sbr.rel (0) target = $region9
    $region8: #{encoder_layer.1} parent=1 // pred_region
      _
    $region9: #{encoder_layer.1} parent=1 // pred_fallthru
      _
    // Predicated region
    $region10: #{encoder_layer.1} parent=1 // pred_check
      _
    $region11: #{encoder_layer.1} parent=1 // pred_check_branch
      %28 = sbr.rel (0) target = $region13
    $region12: #{encoder_layer.1} parent=1 // pred_region
      _
    $region13: #{encoder_layer.1} parent=1 // pred_fallthru
      _
    // Predicated region
    $region14: #{encoder_layer.1} parent=1 // pred_check
      _
    $region15: #{encoder_layer.1} parent=1 // pred_check_branch
      %30 = sbr.rel (0) target = $region17
    $region16: #{encoder_layer.1} parent=1 // pred_region
      _
    $region17: #{encoder_layer.1} parent=1 // pred_fallthru
      _
    // Predicated region
    $region18: #{encoder_layer.1} parent=1 // pred_check
      _
    $region19: #{encoder_layer.1} parent=1 // pred_check_branch
      %32 = sbr.rel (0) target = $region21
    $region20: #{encoder_layer.1} parent=1 // pred_region
      _
    $region21: #{encoder_layer.1} parent=1 // pred_fallthru
      _
    // Predicated region
    $region22: #{encoder_layer.1} parent=1 // pred_check
      _
    $region23: #{encoder_layer.1} parent=1 // pred_check_branch
      %34 = sbr.rel (0) target = $region25
    $region24: #{encoder_layer.1} parent=1 // pred_region
      _
    $region25: #{encoder_layer.1} parent=1 // pred_fallthru
      _
    // Predicated region
    $region26: #{encoder_layer.1} parent=1 // pred_check
      _
    $region27: #{encoder_layer.1} parent=1 // pred_check_branch
      %36 = sbr.rel (0) target = $region29
    $region28: #{encoder_layer.1} parent=1 // pred_region
      %37 = dma.done [#allocation3], 256
    $region29: #{encoder_layer.1} parent=1 // pred_fallthru
      _
    %v38 = vld [vmem:[#allocation2] sm:$0xff]
    %v39 = vld [vmem:[#allocation2 + $0x8] sm:$0xff]
    %v40 = vld [vmem:[%s5] sm:$0xff]
    %v41 = vld [vmem:[%s1] sm:$0xff]
    %v42 = vld [vmem:[%s1 + $0x8] sm:$0xff]
    %v43 = vld [vmem:[%s1 + $0x10] sm:$0xff]
    %v44 = vld [vmem:[%s1 + $0x18] sm:$0xff]
    %v45 = vlaneseq
    %v46 = vshrl.u32 %v45, 7
    %v47 = vsub.s32 0, %v46
    %v48 = vrot.slane %v40, %v47
    %vm49 = vcmask 261120
    %v51 = vsel %vm49, %v38, 0
    %v54 = vsel %vm49, %v39, 0
    %56 = vmatprep.subr.mxu0 0.0
    %57 = vmatpush1.msra.mxu0 %v41
    %58 = vmatprep.subr.mxu0 0.0
    %59 = vmatpush1.msra.mxu0 %v42
    %60 = vmatprep.subr.mxu0 0.0
    %61 = vmatpush1.msra.mxu0 %v43
    %62 = vmatprep.subr.mxu0 0.0
    %63 = vmatpush1.msra.mxu0 %v44
    %64 = vmatprep.subr.mxu0 0.0
    %65 = vmatpush1.msra.mxu0 0.0
    %66 = vmatprep.subr.mxu0 0.0
    %67 = vmatpush1.msra.mxu0 0.0
    %68 = vmatprep.subr.mxu0 0.0
    %69 = vmatpush1.msra.mxu0 0.0
    %70 = vmatprep.subr.mxu0 0.0
    %71 = vmatpush1.msra.mxu0 0.0
    %72 = vmatprep.subr.mxu0 0.0
    %73 = vmatpush1.msra.mxu0 0.0
    %74 = vmatprep.subr.mxu0 0.0
    %75 = vmatpush1.msra.mxu0 0.0
    %76 = vmatprep.subr.mxu0 0.0
    %77 = vmatpush1.msra.mxu0 0.0
    %78 = vmatprep.subr.mxu0 0.0
    %79 = vmatpush1.msra.mxu0 0.0
    %80 = vmatprep.subr.mxu0 0.0
    %81 = vmatpush1.msra.mxu0 0.0
    %82 = vmatprep.subr.mxu0 0.0
    %83 = vmatpush1.msra.mxu0 0.0
    %84 = vmatprep.subr.mxu0 0.0
    %85 = vmatpush1.msra.mxu0 0.0
    %86 = vmatprep.subr.mxu0 0.0
    %87 = vmatpush1.msra.mxu0 0.0
    %88 = vmatprep.subr.mxu0 0.0
    %89 = vmatpush1.msra.mxu0 0.0
    %90 = vmatprep.subr.mxu0 0.0
    %91 = vmatpush1.msra.mxu0 0.0
    %92 = vmatprep.subr.mxu0 0.0
    %93 = vmatpush1.msra.mxu0 0.0
    %94 = vmatprep.subr.mxu0 0.0
    %95 = vmatpush1.msra.mxu0 0.0
    %96 = vmatprep.subr.mxu0 0.0
    %97 = vmatpush1.msra.mxu0 0.0
    %98 = vmatprep.subr.mxu0 0.0
    %99 = vmatpush1.msra.mxu0 0.0
    %100 = vmatprep.subr.mxu0 0.0
    %101 = vmatpush1.msra.mxu0 0.0
    %102 = vmatprep.subr.mxu0 0.0
    %103 = vmatpush1.msra.mxu0 0.0
    %104 = vmatprep.subr.mxu0 0.0
    %105 = vmatpush1.msra.mxu0 0.0
    %106 = vmatprep.subr.mxu0 0.0
    %107 = vmatpush1.msra.mxu0 0.0
    %108 = vmatprep.subr.mxu0 0.0
    %109 = vmatpush1.msra.mxu0 0.0
    %110 = vmatprep.subr.mxu0 0.0
    %111 = vmatpush1.msra.mxu0 0.0
    %112 = vmatprep.subr.mxu0 0.0
    %113 = vmatpush1.msra.mxu0 0.0
    %114 = vmatprep.subr.mxu0 0.0
    %115 = vmatpush1.msra.mxu0 0.0
    %116 = vmatprep.subr.mxu0 0.0
    %117 = vmatpush1.msra.mxu0 0.0
    %118 = vmatprep.subr.mxu0 0.0
    %119 = vmatpush1.msra.mxu0 0.0
    %120 = vmatprep.mubr.f32.mxu0 0.0
    %121 = vmatmul.mubr.f32.gmra.mrb[0].mxu0 %v51
    %v122 = vpop.f32.mrb[0].mxu0
    %v123 = vadd.f32 %v48, %v122
    %v124 = vpop.f32.mrb[0].mxu0
    %125 = vmatprep.mubr.f32.mxu0 0.0
    %126 = vmatmul.mubr.f32.gmra.mrb[0].mxu0 %v54
    %v127 = vpop.f32.mrb[0].mxu0
    %v128 = vadd.f32 %v48, %v127
    %v129 = vpop.f32.mrb[0].mxu0
    %130 = vdwg.mxu0
    %v131 = vmul.f32 %v123, 0.35355338
    %v132 = vmul.f32 %v128, 0.35355338
    %v133 = vlaneseq
    %v134 = vshrl.u32 %v133, 7
    %v135 = vadd.s32 %v134, 8
    %v136 = vlaneseq
    %v137 = vand.u32 %v136, 127
    %vm138 = vcmp.lt.s32.totalorder %v134, 0
    %v139 = vsub.s32 0, %v134
    %v140 = vsel %vm138, %v139, %v134
    %v141 = vshrl.u32 %v140, 1
    %v142 = vand.u32 %v140, 1
    %v143 = vsub.s32 0, %v142
    %v144 = vsel %vm138, %v143, %v142
    %vm145 = vcmp.lt.s32.totalorder %v135, 0
    %v146 = vsub.s32 0, %v135
    %v147 = vsel %vm145, %v146, %v135
    %v148 = vshrl.u32 %v147, 1
    %v149 = vand.u32 %v147, 1
    %v150 = vsub.s32 0, %v149
    %v151 = vsel %vm145, %v150, %v149
    %vm152 = vcmp.ne.s32.totalorder %v144, 0
    %vm153 = vcmp.ne.s32.totalorder %v151, 0
    %vm154 = vcmp.lt.s32.totalorder %v144, 0
    %vm155 = vcmp.lt.s32.totalorder %v151, 0
    %vm156 = vmand %vm154, %vm152
    %vm157 = vmand %vm155, %vm153
    %v158 = vadd.s32 %v144, 2
    %v159 = vadd.s32 %v151, 2
    %v160 = vsel %vm156, %v158, %v144
    %v161 = vsel %vm157, %v159, %v151
    %vm162 = vcmp.lt.s32.totalorder %v137, 0
    %v163 = vsub.s32 0, %v137
    %v164 = vsel %vm162, %v163, %v137
    %v165 = vshrl.u32 %v164, 1
    %v166 = vand.u32 %v164, 1
    %v167 = vsub.s32 0, %v166
    %v168 = vsel %vm162, %v167, %v166
    %vm169 = vcmp.ne.s32.totalorder %v168, 0
    %vm170 = vcmp.lt.s32.totalorder %v168, 0
    %vm171 = vmand %vm170, %vm169
    %v172 = vadd.s32 %v168, 2
    %v173 = vsel %vm171, %v172, %v168
    %vm174 = vcmp.eq.s32.totalorder %v160, %v173
    %vm175 = vcmp.eq.s32.totalorder %v161, %v173
    %v176 = vsel %vm174, 0.0, -1e+30
    %v177 = vsel %vm175, 0.0, -1e+30
    %v178 = vld [vmem:[%s2] sm:$0xff]
    %v179 = vld [vmem:[%s2 + $0x8] sm:$0xff]
    %v180 = vld [vmem:[%s2 + $0x10] sm:$0xff]
    %v181 = vld [vmem:[%s2 + $0x18] sm:$0xff]
    %184 = vrot.lane.b32.xlu0 %v123, 96
    %v185 = vpop.permute.xlu0 %184
    %186 = vrot.lane.b32.xlu0 %v128, 96
    %v187 = vpop.permute.xlu0 %186
    %vm188 = vcmask 64512
    %v190 = vsel %vm188, %v131, 0
    %v193 = vsel %vm188, %v132, 0
    %v195 = vsel %vm188, %v185, 0
    %v197 = vsel %vm188, %v187, 0
    %199 = vmatprep.subr.mxu0 0.0
    %200 = vmatpush1.xpose.msra.mxu0 %v195
    %201 = vmatprep.subr.mxu0 0.0
    %202 = vmatpush1.xpose.msra.mxu0 %v197
    %203 = vmatprep.subr.mxu0 0.0
    %204 = vmatpush1.xpose.msra.mxu0 0.0
    %205 = vmatprep.subr.mxu0 0.0
    %206 = vmatpush1.xpose.msra.mxu0 0.0
    %207 = vmatprep.subr.mxu0 0.0
    %208 = vmatpush1.xpose.msra.mxu0 0.0
    %209 = vmatprep.subr.mxu0 0.0
    %210 = vmatpush1.xpose.msra.mxu0 0.0
    %211 = vmatprep.subr.mxu0 0.0
    %212 = vmatpush1.xpose.msra.mxu0 0.0
    %213 = vmatprep.subr.mxu0 0.0
    %214 = vmatpush1.xpose.msra.mxu0 0.0
    %215 = vmatprep.subr.mxu0 0.0
    %216 = vmatpush1.xpose.msra.mxu0 0.0
    %217 = vmatprep.subr.mxu0 0.0
    %218 = vmatpush1.xpose.msra.mxu0 0.0
    %219 = vmatprep.subr.mxu0 0.0
    %220 = vmatpush1.xpose.msra.mxu0 0.0
    %221 = vmatprep.subr.mxu0 0.0
    %222 = vmatpush1.xpose.msra.mxu0 0.0
    %223 = vmatprep.subr.mxu0 0.0
    %224 = vmatpush1.xpose.msra.mxu0 0.0
    %225 = vmatprep.subr.mxu0 0.0
    %226 = vmatpush1.xpose.msra.mxu0 0.0
    %227 = vmatprep.subr.mxu0 0.0
    %228 = vmatpush1.xpose.msra.mxu0 0.0
    %229 = vmatprep.subr.mxu0 0.0
    %230 = vmatpush1.xpose.msra.mxu0 0.0
    %231 = vmatprep.subr.mxu0 0.0
    %232 = vmatpush1.xpose.msra.mxu0 0.0
    %233 = vmatprep.subr.mxu0 0.0
    %234 = vmatpush1.xpose.msra.mxu0 0.0
    %235 = vmatprep.subr.mxu0 0.0
    %236 = vmatpush1.xpose.msra.mxu0 0.0
    %237 = vmatprep.subr.mxu0 0.0
    %238 = vmatpush1.xpose.msra.mxu0 0.0
    %239 = vmatprep.subr.mxu0 0.0
    %240 = vmatpush1.xpose.msra.mxu0 0.0
    %241 = vmatprep.subr.mxu0 0.0
    %242 = vmatpush1.xpose.msra.mxu0 0.0
    %243 = vmatprep.subr.mxu0 0.0
    %244 = vmatpush1.xpose.msra.mxu0 0.0
    %245 = vmatprep.subr.mxu0 0.0
    %246 = vmatpush1.xpose.msra.mxu0 0.0
    %247 = vmatprep.subr.mxu0 0.0
    %248 = vmatpush1.xpose.msra.mxu0 0.0
    %249 = vmatprep.subr.mxu0 0.0
    %250 = vmatpush1.xpose.msra.mxu0 0.0
    %251 = vmatprep.subr.mxu0 0.0
    %252 = vmatpush1.xpose.msra.mxu0 0.0
    %253 = vmatprep.subr.mxu0 0.0
    %254 = vmatpush1.xpose.msra.mxu0 0.0
    %255 = vmatprep.subr.mxu0 0.0
    %256 = vmatpush1.xpose.msra.mxu0 0.0
    %257 = vmatprep.subr.mxu0 0.0
    %258 = vmatpush1.xpose.msra.mxu0 0.0
    %259 = vmatprep.subr.mxu0 0.0
    %260 = vmatpush1.xpose.msra.mxu0 0.0
    %261 = vmatprep.subr.mxu0 0.0
    %262 = vmatpush1.xpose.msra.mxu0 0.0
    %263 = vmatprep.mubr.f32.mxu0 0.0
    %264 = vmatmul.mubr.f32.gmra.mrb[0].mxu0 %v190
    %v265 = vpop.f32.mrb[0].mxu0
    %v266 = vadd.f32 %v176, %v265
    %v267 = vpop.f32.mrb[0].mxu0
    %268 = vmatprep.mubr.f32.mxu0 0.0
    %269 = vmatmul.mubr.f32.gmra.mrb[0].mxu0 %v193
    %v270 = vpop.f32.mrb[0].mxu0
    %v271 = vadd.f32 %v177, %v270
    %v272 = vpop.f32.mrb[0].mxu0
    %273 = vdwg.mxu0
    %vm274 = vcmask 130048
    %v275 = vsel %vm274, %v266, -inf
    %276 = vmax.xlane.f32.xlu0 %v275
    %v277 = vpop.xlane.xlu0 %276
    %v278 = vsel %vm274, %v271, -inf
    %279 = vmax.xlane.f32.xlu0 %v278
    %v280 = vpop.xlane.xlu0 %279
    %v281 = vsub.f32 %v266, %v277
    %v282 = vsub.f32 %v271, %v280
    %v283 = vmul.f32 %v281, 1.442695
    %v284 = vpow.pop %v283
    %v285 = vmul.f32 %v282, 1.442695
    %v286 = vpow.pop %v285
    %v287 = vsel %vm274, %v284, 0.0
    %288 = vadd.xlane.f32.xlu0 %v287
    %v289 = vpop.xlane.xlu0 %288
    %v290 = vsel %vm274, %v286, 0.0
    %291 = vadd.xlane.f32.xlu0 %v290
    %v292 = vpop.xlane.xlu0 %291
    %293 = vrot.lane.b32.xlu0 %v123, 64
    %v294 = vpop.permute.xlu0 %293
    %295 = vrot.lane.b32.xlu0 %v128, 64
    %v296 = vpop.permute.xlu0 %295
    %v300 = vsel %vm274, %v284, 0
    %v303 = vsel %vm274, %v286, 0
    %305 = vmatprep.subr.mxu0 0.0
    %306 = vmatpush1.msra.mxu0 %v294
    %307 = vmatprep.subr.mxu0 0.0
    %308 = vmatpush1.msra.mxu0 %v296
    %309 = vmatprep.subr.mxu0 0.0
    %310 = vmatpush1.msra.mxu0 0.0
    %311 = vmatprep.subr.mxu0 0.0
    %312 = vmatpush1.msra.mxu0 0.0
    %313 = vmatprep.subr.mxu0 0.0
    %314 = vmatpush1.msra.mxu0 0.0
    %315 = vmatprep.subr.mxu0 0.0
    %316 = vmatpush1.msra.mxu0 0.0
    %317 = vmatprep.subr.mxu0 0.0
    %318 = vmatpush1.msra.mxu0 0.0
    %319 = vmatprep.subr.mxu0 0.0
    %320 = vmatpush1.msra.mxu0 0.0
    %321 = vmatprep.subr.mxu0 0.0
    %322 = vmatpush1.msra.mxu0 0.0
    %323 = vmatprep.subr.mxu0 0.0
    %324 = vmatpush1.msra.mxu0 0.0
    %325 = vmatprep.subr.mxu0 0.0
    %326 = vmatpush1.msra.mxu0 0.0
    %327 = vmatprep.subr.mxu0 0.0
    %328 = vmatpush1.msra.mxu0 0.0
    %329 = vmatprep.subr.mxu0 0.0
    %330 = vmatpush1.msra.mxu0 0.0
    %331 = vmatprep.subr.mxu0 0.0
    %332 = vmatpush1.msra.mxu0 0.0
    %333 = vmatprep.subr.mxu0 0.0
    %334 = vmatpush1.msra.mxu0 0.0
    %335 = vmatprep.subr.mxu0 0.0
    %336 = vmatpush1.msra.mxu0 0.0
    %337 = vmatprep.subr.mxu0 0.0
    %338 = vmatpush1.msra.mxu0 0.0
    %339 = vmatprep.subr.mxu0 0.0
    %340 = vmatpush1.msra.mxu0 0.0
    %341 = vmatprep.subr.mxu0 0.0
    %342 = vmatpush1.msra.mxu0 0.0
    %343 = vmatprep.subr.mxu0 0.0
    %344 = vmatpush1.msra.mxu0 0.0
    %345 = vmatprep.subr.mxu0 0.0
    %346 = vmatpush1.msra.mxu0 0.0
    %347 = vmatprep.subr.mxu0 0.0
    %348 = vmatpush1.msra.mxu0 0.0
    %349 = vmatprep.subr.mxu0 0.0
    %350 = vmatpush1.msra.mxu0 0.0
    %351 = vmatprep.subr.mxu0 0.0
    %352 = vmatpush1.msra.mxu0 0.0
    %353 = vmatprep.subr.mxu0 0.0
    %354 = vmatpush1.msra.mxu0 0.0
    %355 = vmatprep.subr.mxu0 0.0
    %356 = vmatpush1.msra.mxu0 0.0
    %357 = vmatprep.subr.mxu0 0.0
    %358 = vmatpush1.msra.mxu0 0.0
    %359 = vmatprep.subr.mxu0 0.0
    %360 = vmatpush1.msra.mxu0 0.0
    %361 = vmatprep.subr.mxu0 0.0
    %362 = vmatpush1.msra.mxu0 0.0
    %363 = vmatprep.subr.mxu0 0.0
    %364 = vmatpush1.msra.mxu0 0.0
    %365 = vmatprep.subr.mxu0 0.0
    %366 = vmatpush1.msra.mxu0 0.0
    %367 = vmatprep.subr.mxu0 0.0
    %368 = vmatpush1.msra.mxu0 0.0
    %369 = vmatprep.mubr.f32.mxu0 0.0
    %370 = vmatmul.mubr.f32.gmra.mrb[0].mxu0 %v300
    %v371 = vpop.f32.mrb[0].mxu0
    %v372 = vadd.f32 0.0, %v371
    %v373 = vpop.f32.mrb[0].mxu0
    %374 = vmatprep.mubr.f32.mxu0 0.0
    %375 = vmatmul.mubr.f32.gmra.mrb[0].mxu0 %v303
    %v376 = vpop.f32.mrb[0].mxu0
    %v377 = vadd.f32 0.0, %v376
    %v378 = vpop.f32.mrb[0].mxu0
    %379 = vdwg.mxu0
    %v380 = vrcp.pop %v289
    %v381 = vrcp.pop %v292
    %v382 = vmul.f32 %v372, %v380
    %v383 = vmul.f32 %v377, %v381
    %384 = vrot.lane.b32.xlu0 %v131, 120
    %v385 = vpop.permute.xlu0 %384
    %386 = vrot.lane.b32.xlu0 %v132, 120
    %v387 = vpop.permute.xlu0 %386
    %388 = vrot.lane.b32.xlu0 %v123, 88
    %v389 = vpop.permute.xlu0 %388
    %390 = vrot.lane.b32.xlu0 %v128, 88
    %v391 = vpop.permute.xlu0 %390
    %v392 = vsel %vm188, %v385, 0
    %v394 = vsel %vm188, %v387, 0
    %v396 = vsel %vm188, %v389, 0
    %v398 = vsel %vm188, %v391, 0
    %400 = vmatprep.subr.mxu0 0.0
    %401 = vmatpush1.xpose.msra.mxu0 %v396
    %402 = vmatprep.subr.mxu0 0.0
    %403 = vmatpush1.xpose.msra.mxu0 %v398
    %404 = vmatprep.subr.mxu0 0.0
    %405 = vmatpush1.xpose.msra.mxu0 0.0
    %406 = vmatprep.subr.mxu0 0.0
    %407 = vmatpush1.xpose.msra.mxu0 0.0
    %408 = vmatprep.subr.mxu0 0.0
    %409 = vmatpush1.xpose.msra.mxu0 0.0
    %410 = vmatprep.subr.mxu0 0.0
    %411 = vmatpush1.xpose.msra.mxu0 0.0
    %412 = vmatprep.subr.mxu0 0.0
    %413 = vmatpush1.xpose.msra.mxu0 0.0
    %414 = vmatprep.subr.mxu0 0.0
    %415 = vmatpush1.xpose.msra.mxu0 0.0
    %416 = vmatprep.subr.mxu0 0.0
    %417 = vmatpush1.xpose.msra.mxu0 0.0
    %418 = vmatprep.subr.mxu0 0.0
    %419 = vmatpush1.xpose.msra.mxu0 0.0
    %420 = vmatprep.subr.mxu0 0.0
    %421 = vmatpush1.xpose.msra.mxu0 0.0
    %422 = vmatprep.subr.mxu0 0.0
    %423 = vmatpush1.xpose.msra.mxu0 0.0
    %424 = vmatprep.subr.mxu0 0.0
    %425 = vmatpush1.xpose.msra.mxu0 0.0
    %426 = vmatprep.subr.mxu0 0.0
    %427 = vmatpush1.xpose.msra.mxu0 0.0
    %428 = vmatprep.subr.mxu0 0.0
    %429 = vmatpush1.xpose.msra.mxu0 0.0
    %430 = vmatprep.subr.mxu0 0.0
    %431 = vmatpush1.xpose.msra.mxu0 0.0
    %432 = vmatprep.subr.mxu0 0.0
    %433 = vmatpush1.xpose.msra.mxu0 0.0
    %434 = vmatprep.subr.mxu0 0.0
    %435 = vmatpush1.xpose.msra.mxu0 0.0
    %436 = vmatprep.subr.mxu0 0.0
    %437 = vmatpush1.xpose.msra.mxu0 0.0
    %438 = vmatprep.subr.mxu0 0.0
    %439 = vmatpush1.xpose.msra.mxu0 0.0
    %440 = vmatprep.subr.mxu0 0.0
    %441 = vmatpush1.xpose.msra.mxu0 0.0
    %442 = vmatprep.subr.mxu0 0.0
    %443 = vmatpush1.xpose.msra.mxu0 0.0
    %444 = vmatprep.subr.mxu0 0.0
    %445 = vmatpush1.xpose.msra.mxu0 0.0
    %446 = vmatprep.subr.mxu0 0.0
    %447 = vmatpush1.xpose.msra.mxu0 0.0
    %448 = vmatprep.subr.mxu0 0.0
    %449 = vmatpush1.xpose.msra.mxu0 0.0
    %450 = vmatprep.subr.mxu0 0.0
    %451 = vmatpush1.xpose.msra.mxu0 0.0
    %452 = vmatprep.subr.mxu0 0.0
    %453 = vmatpush1.xpose.msra.mxu0 0.0
    %454 = vmatprep.subr.mxu0 0.0
    %455 = vmatpush1.xpose.msra.mxu0 0.0
    %456 = vmatprep.subr.mxu0 0.0
    %457 = vmatpush1.xpose.msra.mxu0 0.0
    %458 = vmatprep.subr.mxu0 0.0
    %459 = vmatpush1.xpose.msra.mxu0 0.0
    %460 = vmatprep.subr.mxu0 0.0
    %461 = vmatpush1.xpose.msra.mxu0 0.0
    %462 = vmatprep.subr.mxu0 0.0
    %463 = vmatpush1.xpose.msra.mxu0 0.0
    %464 = vmatprep.mubr.f32.mxu0 0.0
    %465 = vmatmul.mubr.f32.gmra.mrb[0].mxu0 %v392
    %v466 = vpop.f32.mrb[0].mxu0
    %v467 = vadd.f32 %v176, %v466
    %v468 = vpop.f32.mrb[0].mxu0
    %469 = vmatprep.mubr.f32.mxu0 0.0
    %470 = vmatmul.mubr.f32.gmra.mrb[0].mxu0 %v394
    %v471 = vpop.f32.mrb[0].mxu0
    %v472 = vadd.f32 %v177, %v471
    %v473 = vpop.f32.mrb[0].mxu0
    %474 = vdwg.mxu0
    %v475 = vsel %vm274, %v467, -inf
    %476 = vmax.xlane.f32.xlu0 %v475
    %v477 = vpop.xlane.xlu0 %476
    %v478 = vsel %vm274, %v472, -inf
    %479 = vmax.xlane.f32.xlu0 %v478
    %v480 = vpop.xlane.xlu0 %479
    %v481 = vsub.f32 %v467, %v477
    %v482 = vsub.f32 %v472, %v480
    %v483 = vmul.f32 %v481, 1.442695
    %v484 = vpow.pop %v483
    %v485 = vmul.f32 %v482, 1.442695
    %v486 = vpow.pop %v485
    %v487 = vsel %vm274, %v484, 0.0
    %488 = vadd.xlane.f32.xlu0 %v487
    %v489 = vpop.xlane.xlu0 %488
    %v490 = vsel %vm274, %v486, 0.0
    %491 = vadd.xlane.f32.xlu0 %v490
    %v492 = vpop.xlane.xlu0 %491
    %493 = vrot.lane.b32.xlu0 %v123, 56
    %v494 = vpop.permute.xlu0 %493
    %495 = vrot.lane.b32.xlu0 %v128, 56
    %v496 = vpop.permute.xlu0 %495
    %v500 = vsel %vm274, %v484, 0
    %v503 = vsel %vm274, %v486, 0
    %505 = vmatprep.subr.mxu0 0.0
    %506 = vmatpush1.msra.mxu0 %v494
    %507 = vmatprep.subr.mxu0 0.0
    %508 = vmatpush1.msra.mxu0 %v496
    %509 = vmatprep.subr.mxu0 0.0
    %510 = vmatpush1.msra.mxu0 0.0
    %511 = vmatprep.subr.mxu0 0.0
    %512 = vmatpush1.msra.mxu0 0.0
    %513 = vmatprep.subr.mxu0 0.0
    %514 = vmatpush1.msra.mxu0 0.0
    %515 = vmatprep.subr.mxu0 0.0
    %516 = vmatpush1.msra.mxu0 0.0
    %517 = vmatprep.subr.mxu0 0.0
    %518 = vmatpush1.msra.mxu0 0.0
    %519 = vmatprep.subr.mxu0 0.0
    %520 = vmatpush1.msra.mxu0 0.0
    %521 = vmatprep.subr.mxu0 0.0
    %522 = vmatpush1.msra.mxu0 0.0
    %523 = vmatprep.subr.mxu0 0.0
    %524 = vmatpush1.msra.mxu0 0.0
    %525 = vmatprep.subr.mxu0 0.0
    %526 = vmatpush1.msra.mxu0 0.0
    %527 = vmatprep.subr.mxu0 0.0
    %528 = vmatpush1.msra.mxu0 0.0
    %529 = vmatprep.subr.mxu0 0.0
    %530 = vmatpush1.msra.mxu0 0.0
    %531 = vmatprep.subr.mxu0 0.0
    %532 = vmatpush1.msra.mxu0 0.0
    %533 = vmatprep.subr.mxu0 0.0
    %534 = vmatpush1.msra.mxu0 0.0
    %535 = vmatprep.subr.mxu0 0.0
    %536 = vmatpush1.msra.mxu0 0.0
    %537 = vmatprep.subr.mxu0 0.0
    %538 = vmatpush1.msra.mxu0 0.0
    %539 = vmatprep.subr.mxu0 0.0
    %540 = vmatpush1.msra.mxu0 0.0
    %541 = vmatprep.subr.mxu0 0.0
    %542 = vmatpush1.msra.mxu0 0.0
    %543 = vmatprep.subr.mxu0 0.0
    %544 = vmatpush1.msra.mxu0 0.0
    %545 = vmatprep.subr.mxu0 0.0
    %546 = vmatpush1.msra.mxu0 0.0
    %547 = vmatprep.subr.mxu0 0.0
    %548 = vmatpush1.msra.mxu0 0.0
    %549 = vmatprep.subr.mxu0 0.0
    %550 = vmatpush1.msra.mxu0 0.0
    %551 = vmatprep.subr.mxu0 0.0
    %552 = vmatpush1.msra.mxu0 0.0
    %553 = vmatprep.subr.mxu0 0.0
    %554 = vmatpush1.msra.mxu0 0.0
    %555 = vmatprep.subr.mxu0 0.0
    %556 = vmatpush1.msra.mxu0 0.0
    %557 = vmatprep.subr.mxu0 0.0
    %558 = vmatpush1.msra.mxu0 0.0
    %559 = vmatprep.subr.mxu0 0.0
    %560 = vmatpush1.msra.mxu0 0.0
    %561 = vmatprep.subr.mxu0 0.0
    %562 = vmatpush1.msra.mxu0 0.0
    %563 = vmatprep.subr.mxu0 0.0
    %564 = vmatpush1.msra.mxu0 0.0
    %565 = vmatprep.subr.mxu0 0.0
    %566 = vmatpush1.msra.mxu0 0.0
    %567 = vmatprep.subr.mxu0 0.0
    %568 = vmatpush1.msra.mxu0 0.0
    %569 = vmatprep.mubr.f32.mxu0 0.0
    %570 = vmatmul.mubr.f32.gmra.mrb[0].mxu0 %v500
    %v571 = vpop.f32.mrb[0].mxu0
    %v572 = vadd.f32 0.0, %v571
    %v573 = vpop.f32.mrb[0].mxu0
    %574 = vmatprep.mubr.f32.mxu0 0.0
    %575 = vmatmul.mubr.f32.gmra.mrb[0].mxu0 %v503
    %v576 = vpop.f32.mrb[0].mxu0
    %v577 = vadd.f32 0.0, %v576
    %v578 = vpop.f32.mrb[0].mxu0
    %579 = vdwg.mxu0
    %v580 = vrcp.pop %v489
    %v581 = vrcp.pop %v492
    %v582 = vmul.f32 %v572, %v580
    %v583 = vmul.f32 %v577, %v581
    %v585 = vsel %vm188, %v582, 0
    %v588 = vsel %vm188, %v583, 0
    %590 = vmatprep.subr.mxu0 0.0
    %591 = vmatpush1.msra.mxu0 %v179
    %592 = vmatprep.subr.mxu0 0.0
    %593 = vmatpush1.msra.mxu0 0.0
    %594 = vmatprep.subr.mxu0 0.0
    %595 = vmatpush1.msra.mxu0 0.0
    %596 = vmatprep.subr.mxu0 0.0
    %597 = vmatpush1.msra.mxu0 0.0
    %598 = vmatprep.subr.mxu0 0.0
    %599 = vmatpush1.msra.mxu0 0.0
    %600 = vmatprep.subr.mxu0 0.0
    %601 = vmatpush1.msra.mxu0 0.0
    %602 = vmatprep.subr.mxu0 0.0
    %603 = vmatpush1.msra.mxu0 0.0
    %604 = vmatprep.subr.mxu0 0.0
    %605 = vmatpush1.msra.mxu0 0.0
    %606 = vmatprep.subr.mxu0 0.0
    %607 = vmatpush1.msra.mxu0 0.0
    %608 = vmatprep.subr.mxu0 0.0
    %609 = vmatpush1.msra.mxu0 0.0
    %610 = vmatprep.subr.mxu0 0.0
    %611 = vmatpush1.msra.mxu0 0.0
    %612 = vmatprep.subr.mxu0 0.0
    %613 = vmatpush1.msra.mxu0 0.0
    %614 = vmatprep.subr.mxu0 0.0
    %615 = vmatpush1.msra.mxu0 0.0
    %616 = vmatprep.subr.mxu0 0.0
    %617 = vmatpush1.msra.mxu0 0.0
    %618 = vmatprep.subr.mxu0 0.0
    %619 = vmatpush1.msra.mxu0 0.0
    %620 = vmatprep.subr.mxu0 0.0
    %621 = vmatpush1.msra.mxu0 0.0
    %622 = vmatprep.subr.mxu0 0.0
    %623 = vmatpush1.msra.mxu0 0.0
    %624 = vmatprep.subr.mxu0 0.0
    %625 = vmatpush1.msra.mxu0 0.0
    %626 = vmatprep.subr.mxu0 0.0
    %627 = vmatpush1.msra.mxu0 0.0
    %628 = vmatprep.subr.mxu0 0.0
    %629 = vmatpush1.msra.mxu0 0.0
    %630 = vmatprep.subr.mxu0 0.0
    %631 = vmatpush1.msra.mxu0 0.0
    %632 = vmatprep.subr.mxu0 0.0
    %633 = vmatpush1.msra.mxu0 0.0
    %634 = vmatprep.subr.mxu0 0.0
    %635 = vmatpush1.msra.mxu0 0.0
    %636 = vmatprep.subr.mxu0 0.0
    %637 = vmatpush1.msra.mxu0 0.0
    %638 = vmatprep.subr.mxu0 0.0
    %639 = vmatpush1.msra.mxu0 0.0
    %640 = vmatprep.subr.mxu0 0.0
    %641 = vmatpush1.msra.mxu0 0.0
    %642 = vmatprep.subr.mxu0 0.0
    %643 = vmatpush1.msra.mxu0 0.0
    %644 = vmatprep.subr.mxu0 0.0
    %645 = vmatpush1.msra.mxu0 0.0
    %646 = vmatprep.subr.mxu0 0.0
    %647 = vmatpush1.msra.mxu0 0.0
    %648 = vmatprep.subr.mxu0 0.0
    %649 = vmatpush1.msra.mxu0 0.0
    %650 = vmatprep.subr.mxu0 0.0
    %651 = vmatpush1.msra.mxu0 0.0
    %652 = vmatprep.subr.mxu0 0.0
    %653 = vmatpush1.msra.mxu0 0.0
    %654 = vmatprep.mubr.f32.mxu0 0.0
    %655 = vmatmul.mubr.f32.gmra.mrb[0].mxu0 %v585
    %v656 = vpop.f32.mrb[0].mxu0
    %v657 = vadd.f32 0.0, %v656
    %v658 = vpop.f32.mrb[0].mxu0
    %659 = vmatprep.mubr.f32.mxu0 0.0
    %660 = vmatmul.mubr.f32.gmra.mrb[0].mxu0 %v588
    %v661 = vpop.f32.mrb[0].mxu0
    %v662 = vadd.f32 0.0, %v661
    %v663 = vpop.f32.mrb[0].mxu0
    %664 = vdwg.mxu0
    %v666 = vsel %vm188, %v382, 0
    %v669 = vsel %vm188, %v383, 0
    %671 = vmatprep.subr.mxu0 0.0
    %672 = vmatpush1.msra.mxu0 %v178
    %673 = vmatprep.subr.mxu0 0.0
    %674 = vmatpush1.msra.mxu0 0.0
    %675 = vmatprep.subr.mxu0 0.0
    %676 = vmatpush1.msra.mxu0 0.0
    %677 = vmatprep.subr.mxu0 0.0
    %678 = vmatpush1.msra.mxu0 0.0
    %679 = vmatprep.subr.mxu0 0.0
    %680 = vmatpush1.msra.mxu0 0.0
    %681 = vmatprep.subr.mxu0 0.0
    %682 = vmatpush1.msra.mxu0 0.0
    %683 = vmatprep.subr.mxu0 0.0
    %684 = vmatpush1.msra.mxu0 0.0
    %685 = vmatprep.subr.mxu0 0.0
    %686 = vmatpush1.msra.mxu0 0.0
    %687 = vmatprep.subr.mxu0 0.0
    %688 = vmatpush1.msra.mxu0 0.0
    %689 = vmatprep.subr.mxu0 0.0
    %690 = vmatpush1.msra.mxu0 0.0
    %691 = vmatprep.subr.mxu0 0.0
    %692 = vmatpush1.msra.mxu0 0.0
    %693 = vmatprep.subr.mxu0 0.0
    %694 = vmatpush1.msra.mxu0 0.0
    %695 = vmatprep.subr.mxu0 0.0
    %696 = vmatpush1.msra.mxu0 0.0
    %697 = vmatprep.subr.mxu0 0.0
    %698 = vmatpush1.msra.mxu0 0.0
    %699 = vmatprep.subr.mxu0 0.0
    %700 = vmatpush1.msra.mxu0 0.0
    %701 = vmatprep.subr.mxu0 0.0
    %702 = vmatpush1.msra.mxu0 0.0
    %703 = vmatprep.subr.mxu0 0.0
    %704 = vmatpush1.msra.mxu0 0.0
    %705 = vmatprep.subr.mxu0 0.0
    %706 = vmatpush1.msra.mxu0 0.0
    %707 = vmatprep.subr.mxu0 0.0
    %708 = vmatpush1.msra.mxu0 0.0
    %709 = vmatprep.subr.mxu0 0.0
    %710 = vmatpush1.msra.mxu0 0.0
    %711 = vmatprep.subr.mxu0 0.0
    %712 = vmatpush1.msra.mxu0 0.0
    %713 = vmatprep.subr.mxu0 0.0
    %714 = vmatpush1.msra.mxu0 0.0
    %715 = vmatprep.subr.mxu0 0.0
    %716 = vmatpush1.msra.mxu0 0.0
    %717 = vmatprep.subr.mxu0 0.0
    %718 = vmatpush1.msra.mxu0 0.0
    %719 = vmatprep.subr.mxu0 0.0
    %720 = vmatpush1.msra.mxu0 0.0
    %721 = vmatprep.subr.mxu0 0.0
    %722 = vmatpush1.msra.mxu0 0.0
    %723 = vmatprep.subr.mxu0 0.0
    %724 = vmatpush1.msra.mxu0 0.0
    %725 = vmatprep.subr.mxu0 0.0
    %726 = vmatpush1.msra.mxu0 0.0
    %727 = vmatprep.subr.mxu0 0.0
    %728 = vmatpush1.msra.mxu0 0.0
    %729 = vmatprep.subr.mxu0 0.0
    %730 = vmatpush1.msra.mxu0 0.0
    %731 = vmatprep.subr.mxu0 0.0
    %732 = vmatpush1.msra.mxu0 0.0
    %733 = vmatprep.subr.mxu0 0.0
    %734 = vmatpush1.msra.mxu0 0.0
    %735 = vmatprep.mubr.f32.mxu0 0.0
    %736 = vmatmul.mubr.f32.gmra.mrb[0].mxu0 %v666
    %v737 = vpop.f32.mrb[0].mxu0
    %v738 = vadd.f32 %v657, %v737
    %v739 = vpop.f32.mrb[0].mxu0
    %740 = vmatprep.mubr.f32.mxu0 0.0
    %741 = vmatmul.mubr.f32.gmra.mrb[0].mxu0 %v669
    %v742 = vpop.f32.mrb[0].mxu0
    %v743 = vadd.f32 %v662, %v742
    %v744 = vpop.f32.mrb[0].mxu0
    %745 = vdwg.mxu0
    %746 = vrot.lane.b32.xlu0 %v131, 112
    %v747 = vpop.permute.xlu0 %746
    %748 = vrot.lane.b32.xlu0 %v132, 112
    %v749 = vpop.permute.xlu0 %748
    %750 = vrot.lane.b32.xlu0 %v123, 80
    %v751 = vpop.permute.xlu0 %750
    %752 = vrot.lane.b32.xlu0 %v128, 80
    %v753 = vpop.permute.xlu0 %752
    %v754 = vsel %vm188, %v747, 0
    %v756 = vsel %vm188, %v749, 0
    %v758 = vsel %vm188, %v751, 0
    %v760 = vsel %vm188, %v753, 0
    %762 = vmatprep.subr.mxu0 0.0
    %763 = vmatpush1.xpose.msra.mxu0 %v758
    %764 = vmatprep.subr.mxu0 0.0
    %765 = vmatpush1.xpose.msra.mxu0 %v760
    %766 = vmatprep.subr.mxu0 0.0
    %767 = vmatpush1.xpose.msra.mxu0 0.0
    %768 = vmatprep.subr.mxu0 0.0
    %769 = vmatpush1.xpose.msra.mxu0 0.0
    %770 = vmatprep.subr.mxu0 0.0
    %771 = vmatpush1.xpose.msra.mxu0 0.0
    %772 = vmatprep.subr.mxu0 0.0
    %773 = vmatpush1.xpose.msra.mxu0 0.0
    %774 = vmatprep.subr.mxu0 0.0
    %775 = vmatpush1.xpose.msra.mxu0 0.0
    %776 = vmatprep.subr.mxu0 0.0
    %777 = vmatpush1.xpose.msra.mxu0 0.0
    %778 = vmatprep.subr.mxu0 0.0
    %779 = vmatpush1.xpose.msra.mxu0 0.0
    %780 = vmatprep.subr.mxu0 0.0
    %781 = vmatpush1.xpose.msra.mxu0 0.0
    %782 = vmatprep.subr.mxu0 0.0
    %783 = vmatpush1.xpose.msra.mxu0 0.0
    %784 = vmatprep.subr.mxu0 0.0
    %785 = vmatpush1.xpose.msra.mxu0 0.0
    %786 = vmatprep.subr.mxu0 0.0
    %787 = vmatpush1.xpose.msra.mxu0 0.0
    %788 = vmatprep.subr.mxu0 0.0
    %789 = vmatpush1.xpose.msra.mxu0 0.0
    %790 = vmatprep.subr.mxu0 0.0
    %791 = vmatpush1.xpose.msra.mxu0 0.0
    %792 = vmatprep.subr.mxu0 0.0
    %793 = vmatpush1.xpose.msra.mxu0 0.0
    %794 = vmatprep.subr.mxu0 0.0
    %795 = vmatpush1.xpose.msra.mxu0 0.0
    %796 = vmatprep.subr.mxu0 0.0
    %797 = vmatpush1.xpose.msra.mxu0 0.0
    %798 = vmatprep.subr.mxu0 0.0
    %799 = vmatpush1.xpose.msra.mxu0 0.0
    %800 = vmatprep.subr.mxu0 0.0
    %801 = vmatpush1.xpose.msra.mxu0 0.0
    %802 = vmatprep.subr.mxu0 0.0
    %803 = vmatpush1.xpose.msra.mxu0 0.0
    %804 = vmatprep.subr.mxu0 0.0
    %805 = vmatpush1.xpose.msra.mxu0 0.0
    %806 = vmatprep.subr.mxu0 0.0
    %807 = vmatpush1.xpose.msra.mxu0 0.0
    %808 = vmatprep.subr.mxu0 0.0
    %809 = vmatpush1.xpose.msra.mxu0 0.0
    %810 = vmatprep.subr.mxu0 0.0
    %811 = vmatpush1.xpose.msra.mxu0 0.0
    %812 = vmatprep.subr.mxu0 0.0
    %813 = vmatpush1.xpose.msra.mxu0 0.0
    %814 = vmatprep.subr.mxu0 0.0
    %815 = vmatpush1.xpose.msra.mxu0 0.0
    %816 = vmatprep.subr.mxu0 0.0
    %817 = vmatpush1.xpose.msra.mxu0 0.0
    %818 = vmatprep.subr.mxu0 0.0
    %819 = vmatpush1.xpose.msra.mxu0 0.0
    %820 = vmatprep.subr.mxu0 0.0
    %821 = vmatpush1.xpose.msra.mxu0 0.0
    %822 = vmatprep.subr.mxu0 0.0
    %823 = vmatpush1.xpose.msra.mxu0 0.0
    %824 = vmatprep.subr.mxu0 0.0
    %825 = vmatpush1.xpose.msra.mxu0 0.0
    %826 = vmatprep.mubr.f32.mxu0 0.0
    %827 = vmatmul.mubr.f32.gmra.mrb[0].mxu0 %v754
    %v828 = vpop.f32.mrb[0].mxu0
    %v829 = vadd.f32 %v176, %v828
    %v830 = vpop.f32.mrb[0].mxu0
    %831 = vmatprep.mubr.f32.mxu0 0.0
    %832 = vmatmul.mubr.f32.gmra.mrb[0].mxu0 %v756
    %v833 = vpop.f32.mrb[0].mxu0
    %v834 = vadd.f32 %v177, %v833
    %v835 = vpop.f32.mrb[0].mxu0
    %836 = vdwg.mxu0
    %v837 = vsel %vm274, %v829, -inf
    %838 = vmax.xlane.f32.xlu0 %v837
    %v839 = vpop.xlane.xlu0 %838
    %v840 = vsel %vm274, %v834, -inf
    %841 = vmax.xlane.f32.xlu0 %v840
    %v842 = vpop.xlane.xlu0 %841
    %v843 = vsub.f32 %v829, %v839
    %v844 = vsub.f32 %v834, %v842
    %v845 = vmul.f32 %v843, 1.442695
    %v846 = vpow.pop %v845
    %v847 = vmul.f32 %v844, 1.442695
    %v848 = vpow.pop %v847
    %v849 = vsel %vm274, %v846, 0.0
    %850 = vadd.xlane.f32.xlu0 %v849
    %v851 = vpop.xlane.xlu0 %850
    %v852 = vsel %vm274, %v848, 0.0
    %853 = vadd.xlane.f32.xlu0 %v852
    %v854 = vpop.xlane.xlu0 %853
    %855 = vrot.lane.b32.xlu0 %v123, 48
    %v856 = vpop.permute.xlu0 %855
    %857 = vrot.lane.b32.xlu0 %v128, 48
    %v858 = vpop.permute.xlu0 %857
    %v862 = vsel %vm274, %v846, 0
    %v865 = vsel %vm274, %v848, 0
    %867 = vmatprep.subr.mxu0 0.0
    %868 = vmatpush1.msra.mxu0 %v856
    %869 = vmatprep.subr.mxu0 0.0
    %870 = vmatpush1.msra.mxu0 %v858
    %871 = vmatprep.subr.mxu0 0.0
    %872 = vmatpush1.msra.mxu0 0.0
    %873 = vmatprep.subr.mxu0 0.0
    %874 = vmatpush1.msra.mxu0 0.0
    %875 = vmatprep.subr.mxu0 0.0
    %876 = vmatpush1.msra.mxu0 0.0
    %877 = vmatprep.subr.mxu0 0.0
    %878 = vmatpush1.msra.mxu0 0.0
    %879 = vmatprep.subr.mxu0 0.0
    %880 = vmatpush1.msra.mxu0 0.0
    %881 = vmatprep.subr.mxu0 0.0
    %882 = vmatpush1.msra.mxu0 0.0
    %883 = vmatprep.subr.mxu0 0.0
    %884 = vmatpush1.msra.mxu0 0.0
    %885 = vmatprep.subr.mxu0 0.0
    %886 = vmatpush1.msra.mxu0 0.0
    %887 = vmatprep.subr.mxu0 0.0
    %888 = vmatpush1.msra.mxu0 0.0
    %889 = vmatprep.subr.mxu0 0.0
    %890 = vmatpush1.msra.mxu0 0.0
    %891 = vmatprep.subr.mxu0 0.0
    %892 = vmatpush1.msra.mxu0 0.0
    %893 = vmatprep.subr.mxu0 0.0
    %894 = vmatpush1.msra.mxu0 0.0
    %895 = vmatprep.subr.mxu0 0.0
    %896 = vmatpush1.msra.mxu0 0.0
    %897 = vmatprep.subr.mxu0 0.0
    %898 = vmatpush1.msra.mxu0 0.0
    %899 = vmatprep.subr.mxu0 0.0
    %900 = vmatpush1.msra.mxu0 0.0
    %901 = vmatprep.subr.mxu0 0.0
    %902 = vmatpush1.msra.mxu0 0.0
    %903 = vmatprep.subr.mxu0 0.0
    %904 = vmatpush1.msra.mxu0 0.0
    %905 = vmatprep.subr.mxu0 0.0
    %906 = vmatpush1.msra.mxu0 0.0
    %907 = vmatprep.subr.mxu0 0.0
    %908 = vmatpush1.msra.mxu0 0.0
    %909 = vmatprep.subr.mxu0 0.0
    %910 = vmatpush1.msra.mxu0 0.0
    %911 = vmatprep.subr.mxu0 0.0
    %912 = vmatpush1.msra.mxu0 0.0
    %913 = vmatprep.subr.mxu0 0.0
    %914 = vmatpush1.msra.mxu0 0.0
    %915 = vmatprep.subr.mxu0 0.0
    %916 = vmatpush1.msra.mxu0 0.0
    %917 = vmatprep.subr.mxu0 0.0
    %918 = vmatpush1.msra.mxu0 0.0
    %919 = vmatprep.subr.mxu0 0.0
    %920 = vmatpush1.msra.mxu0 0.0
    %921 = vmatprep.subr.mxu0 0.0
    %922 = vmatpush1.msra.mxu0 0.0
    %923 = vmatprep.subr.mxu0 0.0
    %924 = vmatpush1.msra.mxu0 0.0
    %925 = vmatprep.subr.mxu0 0.0
    %926 = vmatpush1.msra.mxu0 0.0
    %927 = vmatprep.subr.mxu0 0.0
    %928 = vmatpush1.msra.mxu0 0.0
    %929 = vmatprep.subr.mxu0 0.0
    %930 = vmatpush1.msra.mxu0 0.0
    %931 = vmatprep.mubr.f32.mxu0 0.0
    %932 = vmatmul.mubr.f32.gmra.mrb[0].mxu0 %v862
    %v933 = vpop.f32.mrb[0].mxu0
    %v934 = vadd.f32 0.0, %v933
    %v935 = vpop.f32.mrb[0].mxu0
    %936 = vmatprep.mubr.f32.mxu0 0.0
    %937 = vmatmul.mubr.f32.gmra.mrb[0].mxu0 %v865
    %v938 = vpop.f32.mrb[0].mxu0
    %v939 = vadd.f32 0.0, %v938
    %v940 = vpop.f32.mrb[0].mxu0
    %941 = vdwg.mxu0
    %v942 = vrcp.pop %v851
    %v943 = vrcp.pop %v854
    %v944 = vmul.f32 %v934, %v942
    %v945 = vmul.f32 %v939, %v943
    %v947 = vsel %vm188, %v944, 0
    %v950 = vsel %vm188, %v945, 0
    %952 = vmatprep.subr.mxu0 0.0
    %953 = vmatpush1.msra.mxu0 %v180
    %954 = vmatprep.subr.mxu0 0.0
    %955 = vmatpush1.msra.mxu0 0.0
    %956 = vmatprep.subr.mxu0 0.0
    %957 = vmatpush1.msra.mxu0 0.0
    %958 = vmatprep.subr.mxu0 0.0
    %959 = vmatpush1.msra.mxu0 0.0
    %960 = vmatprep.subr.mxu0 0.0
    %961 = vmatpush1.msra.mxu0 0.0
    %962 = vmatprep.subr.mxu0 0.0
    %963 = vmatpush1.msra.mxu0 0.0
    %964 = vmatprep.subr.mxu0 0.0
    %965 = vmatpush1.msra.mxu0 0.0
    %966 = vmatprep.subr.mxu0 0.0
    %967 = vmatpush1.msra.mxu0 0.0
    %968 = vmatprep.subr.mxu0 0.0
    %969 = vmatpush1.msra.mxu0 0.0
    %970 = vmatprep.subr.mxu0 0.0
    %971 = vmatpush1.msra.mxu0 0.0
    %972 = vmatprep.subr.mxu0 0.0
    %973 = vmatpush1.msra.mxu0 0.0
    %974 = vmatprep.subr.mxu0 0.0
    %975 = vmatpush1.msra.mxu0 0.0
    %976 = vmatprep.subr.mxu0 0.0
    %977 = vmatpush1.msra.mxu0 0.0
    %978 = vmatprep.subr.mxu0 0.0
    %979 = vmatpush1.msra.mxu0 0.0
    %980 = vmatprep.subr.mxu0 0.0
    %981 = vmatpush1.msra.mxu0 0.0
    %982 = vmatprep.subr.mxu0 0.0
    %983 = vmatpush1.msra.mxu0 0.0
    %984 = vmatprep.subr.mxu0 0.0
    %985 = vmatpush1.msra.mxu0 0.0
    %986 = vmatprep.subr.mxu0 0.0
    %987 = vmatpush1.msra.mxu0 0.0
    %988 = vmatprep.subr.mxu0 0.0
    %989 = vmatpush1.msra.mxu0 0.0
    %990 = vmatprep.subr.mxu0 0.0
    %991 = vmatpush1.msra.mxu0 0.0
    %992 = vmatprep.subr.mxu0 0.0
    %993 = vmatpush1.msra.mxu0 0.0
    %994 = vmatprep.subr.mxu0 0.0
    %995 = vmatpush1.msra.mxu0 0.0
    %996 = vmatprep.subr.mxu0 0.0
    %997 = vmatpush1.msra.mxu0 0.0
    %998 = vmatprep.subr.mxu0 0.0
    %999 = vmatpush1.msra.mxu0 0.0
    %1000 = vmatprep.subr.mxu0 0.0
    %1001 = vmatpush1.msra.mxu0 0.0
    %1002 = vmatprep.subr.mxu0 0.0
    %1003 = vmatpush1.msra.mxu0 0.0
    %1004 = vmatprep.subr.mxu0 0.0
    %1005 = vmatpush1.msra.mxu0 0.0
    %1006 = vmatprep.subr.mxu0 0.0
    %1007 = vmatpush1.msra.mxu0 0.0
    %1008 = vmatprep.subr.mxu0 0.0
    %1009 = vmatpush1.msra.mxu0 0.0
    %1010 = vmatprep.subr.mxu0 0.0
    %1011 = vmatpush1.msra.mxu0 0.0
    %1012 = vmatprep.subr.mxu0 0.0
    %1013 = vmatpush1.msra.mxu0 0.0
    %1014 = vmatprep.subr.mxu0 0.0
    %1015 = vmatpush1.msra.mxu0 0.0
    %1016 = vmatprep.mubr.f32.mxu0 0.0
    %1017 = vmatmul.mubr.f32.gmra.mrb[0].mxu0 %v947
    %v1018 = vpop.f32.mrb[0].mxu0
    %v1019 = vadd.f32 0.0, %v1018
    %v1020 = vpop.f32.mrb[0].mxu0
    %1021 = vmatprep.mubr.f32.mxu0 0.0
    %1022 = vmatmul.mubr.f32.gmra.mrb[0].mxu0 %v950
    %v1023 = vpop.f32.mrb[0].mxu0
    %v1024 = vadd.f32 0.0, %v1023
    %v1025 = vpop.f32.mrb[0].mxu0
    %1026 = vdwg.mxu0
    %v1027 = vadd.f32 %v738, %v1019
    %v1028 = vadd.f32 %v743, %v1024
    %1029 = vrot.lane.b32.xlu0 %v131, 104
    %v1030 = vpop.permute.xlu0 %1029
    %1031 = vrot.lane.b32.xlu0 %v132, 104
    %v1032 = vpop.permute.xlu0 %1031
    %1033 = vrot.lane.b32.xlu0 %v123, 72
    %v1034 = vpop.permute.xlu0 %1033
    %1035 = vrot.lane.b32.xlu0 %v128, 72
    %v1036 = vpop.permute.xlu0 %1035
    %v1037 = vsel %vm188, %v1030, 0
    %v1039 = vsel %vm188, %v1032, 0
    %v1041 = vsel %vm188, %v1034, 0
    %v1043 = vsel %vm188, %v1036, 0
    %1045 = vmatprep.subr.mxu0 0.0
    %1046 = vmatpush1.xpose.msra.mxu0 %v1041
    %1047 = vmatprep.subr.mxu0 0.0
    %1048 = vmatpush1.xpose.msra.mxu0 %v1043
    %1049 = vmatprep.subr.mxu0 0.0
    %1050 = vmatpush1.xpose.msra.mxu0 0.0
    %1051 = vmatprep.subr.mxu0 0.0
    %1052 = vmatpush1.xpose.msra.mxu0 0.0
    %1053 = vmatprep.subr.mxu0 0.0
    %1054 = vmatpush1.xpose.msra.mxu0 0.0
    %1055 = vmatprep.subr.mxu0 0.0
    %1056 = vmatpush1.xpose.msra.mxu0 0.0
    %1057 = vmatprep.subr.mxu0 0.0
    %1058 = vmatpush1.xpose.msra.mxu0 0.0
    %1059 = vmatprep.subr.mxu0 0.0
    %1060 = vmatpush1.xpose.msra.mxu0 0.0
    %1061 = vmatprep.subr.mxu0 0.0
    %1062 = vmatpush1.xpose.msra.mxu0 0.0
    %1063 = vmatprep.subr.mxu0 0.0
    %1064 = vmatpush1.xpose.msra.mxu0 0.0
    %1065 = vmatprep.subr.mxu0 0.0
    %1066 = vmatpush1.xpose.msra.mxu0 0.0
    %1067 = vmatprep.subr.mxu0 0.0
    %1068 = vmatpush1.xpose.msra.mxu0 0.0
    %1069 = vmatprep.subr.mxu0 0.0
    %1070 = vmatpush1.xpose.msra.mxu0 0.0
    %1071 = vmatprep.subr.mxu0 0.0
    %1072 = vmatpush1.xpose.msra.mxu0 0.0
    %1073 = vmatprep.subr.mxu0 0.0
    %1074 = vmatpush1.xpose.msra.mxu0 0.0
    %1075 = vmatprep.subr.mxu0 0.0
    %1076 = vmatpush1.xpose.msra.mxu0 0.0
    %1077 = vmatprep.subr.mxu0 0.0
    %1078 = vmatpush1.xpose.msra.mxu0 0.0
    %1079 = vmatprep.subr.mxu0 0.0
    %1080 = vmatpush1.xpose.msra.mxu0 0.0
    %1081 = vmatprep.subr.mxu0 0.0
    %1082 = vmatpush1.xpose.msra.mxu0 0.0
    %1083 = vmatprep.subr.mxu0 0.0
    %1084 = vmatpush1.xpose.msra.mxu0 0.0
    %1085 = vmatprep.subr.mxu0 0.0
    %1086 = vmatpush1.xpose.msra.mxu0 0.0
    %1087 = vmatprep.subr.mxu0 0.0
    %1088 = vmatpush1.xpose.msra.mxu0 0.0
    %1089 = vmatprep.subr.mxu0 0.0
    %1090 = vmatpush1.xpose.msra.mxu0 0.0
    %1091 = vmatprep.subr.mxu0 0.0
    %1092 = vmatpush1.xpose.msra.mxu0 0.0
    %1093 = vmatprep.subr.mxu0 0.0
    %1094 = vmatpush1.xpose.msra.mxu0 0.0
    %1095 = vmatprep.subr.mxu0 0.0
    %1096 = vmatpush1.xpose.msra.mxu0 0.0
    %1097 = vmatprep.subr.mxu0 0.0
    %1098 = vmatpush1.xpose.msra.mxu0 0.0
    %1099 = vmatprep.subr.mxu0 0.0
    %1100 = vmatpush1.xpose.msra.mxu0 0.0
    %1101 = vmatprep.subr.mxu0 0.0
    %1102 = vmatpush1.xpose.msra.mxu0 0.0
    %1103 = vmatprep.subr.mxu0 0.0
    %1104 = vmatpush1.xpose.msra.mxu0 0.0
    %1105 = vmatprep.subr.mxu0 0.0
    %1106 = vmatpush1.xpose.msra.mxu0 0.0
    %1107 = vmatprep.subr.mxu0 0.0
    %1108 = vmatpush1.xpose.msra.mxu0 0.0
    %1109 = vmatprep.mubr.f32.mxu0 0.0
    %1110 = vmatmul.mubr.f32.gmra.mrb[0].mxu0 %v1037
    %v1111 = vpop.f32.mrb[0].mxu0
    %v1112 = vadd.f32 %v176, %v1111
    %v1113 = vpop.f32.mrb[0].mxu0
    %1114 = vmatprep.mubr.f32.mxu0 0.0
    %1115 = vmatmul.mubr.f32.gmra.mrb[0].mxu0 %v1039
    %v1116 = vpop.f32.mrb[0].mxu0
    %v1117 = vadd.f32 %v177, %v1116
    %v1118 = vpop.f32.mrb[0].mxu0
    %1119 = vdwg.mxu0
    %v1120 = vsel %vm274, %v1112, -inf
    %1121 = vmax.xlane.f32.xlu0 %v1120
    %v1122 = vpop.xlane.xlu0 %1121
    %v1123 = vsel %vm274, %v1117, -inf
    %1124 = vmax.xlane.f32.xlu0 %v1123
    %v1125 = vpop.xlane.xlu0 %1124
    %v1126 = vsub.f32 %v1112, %v1122
    %v1127 = vsub.f32 %v1117, %v1125
    %v1128 = vmul.f32 %v1126, 1.442695
    %v1129 = vpow.pop %v1128
    %v1130 = vmul.f32 %v1127, 1.442695
    %v1131 = vpow.pop %v1130
    %v1132 = vsel %vm274, %v1129, 0.0
    %1133 = vadd.xlane.f32.xlu0 %v1132
    %v1134 = vpop.xlane.xlu0 %1133
    %v1135 = vsel %vm274, %v1131, 0.0
    %1136 = vadd.xlane.f32.xlu0 %v1135
    %v1137 = vpop.xlane.xlu0 %1136
    %1138 = vrot.lane.b32.xlu0 %v123, 40
    %v1139 = vpop.permute.xlu0 %1138
    %1140 = vrot.lane.b32.xlu0 %v128, 40
    %v1141 = vpop.permute.xlu0 %1140
    %v1145 = vsel %vm274, %v1129, 0
    %v1148 = vsel %vm274, %v1131, 0
    %1150 = vmatprep.subr.mxu0 0.0
    %1151 = vmatpush1.msra.mxu0 %v1139
    %1152 = vmatprep.subr.mxu0 0.0
    %1153 = vmatpush1.msra.mxu0 %v1141
    %1154 = vmatprep.subr.mxu0 0.0
    %1155 = vmatpush1.msra.mxu0 0.0
    %1156 = vmatprep.subr.mxu0 0.0
    %1157 = vmatpush1.msra.mxu0 0.0
    %1158 = vmatprep.subr.mxu0 0.0
    %1159 = vmatpush1.msra.mxu0 0.0
    %1160 = vmatprep.subr.mxu0 0.0
    %1161 = vmatpush1.msra.mxu0 0.0
    %1162 = vmatprep.subr.mxu0 0.0
    %1163 = vmatpush1.msra.mxu0 0.0
    %1164 = vmatprep.subr.mxu0 0.0
    %1165 = vmatpush1.msra.mxu0 0.0
    %1166 = vmatprep.subr.mxu0 0.0
    %1167 = vmatpush1.msra.mxu0 0.0
    %1168 = vmatprep.subr.mxu0 0.0
    %1169 = vmatpush1.msra.mxu0 0.0
    %1170 = vmatprep.subr.mxu0 0.0
    %1171 = vmatpush1.msra.mxu0 0.0
    %1172 = vmatprep.subr.mxu0 0.0
    %1173 = vmatpush1.msra.mxu0 0.0
    %1174 = vmatprep.subr.mxu0 0.0
    %1175 = vmatpush1.msra.mxu0 0.0
    %1176 = vmatprep.subr.mxu0 0.0
    %1177 = vmatpush1.msra.mxu0 0.0
    %1178 = vmatprep.subr.mxu0 0.0
    %1179 = vmatpush1.msra.mxu0 0.0
    %1180 = vmatprep.subr.mxu0 0.0
    %1181 = vmatpush1.msra.mxu0 0.0
    %1182 = vmatprep.subr.mxu0 0.0
    %1183 = vmatpush1.msra.mxu0 0.0
    %1184 = vmatprep.subr.mxu0 0.0
    %1185 = vmatpush1.msra.mxu0 0.0
    %1186 = vmatprep.subr.mxu0 0.0
    %1187 = vmatpush1.msra.mxu0 0.0
    %1188 = vmatprep.subr.mxu0 0.0
    %1189 = vmatpush1.msra.mxu0 0.0
    %1190 = vmatprep.subr.mxu0 0.0
    %1191 = vmatpush1.msra.mxu0 0.0
    %1192 = vmatprep.subr.mxu0 0.0
    %1193 = vmatpush1.msra.mxu0 0.0
    %1194 = vmatprep.subr.mxu0 0.0
    %1195 = vmatpush1.msra.mxu0 0.0
    %1196 = vmatprep.subr.mxu0 0.0
    %1197 = vmatpush1.msra.mxu0 0.0
    %1198 = vmatprep.subr.mxu0 0.0
    %1199 = vmatpush1.msra.mxu0 0.0
    %1200 = vmatprep.subr.mxu0 0.0
    %1201 = vmatpush1.msra.mxu0 0.0
    %1202 = vmatprep.subr.mxu0 0.0
    %1203 = vmatpush1.msra.mxu0 0.0
    %1204 = vmatprep.subr.mxu0 0.0
    %1205 = vmatpush1.msra.mxu0 0.0
    %1206 = vmatprep.subr.mxu0 0.0
    %1207 = vmatpush1.msra.mxu0 0.0
    %1208 = vmatprep.subr.mxu0 0.0
    %1209 = vmatpush1.msra.mxu0 0.0
    %1210 = vmatprep.subr.mxu0 0.0
    %1211 = vmatpush1.msra.mxu0 0.0
    %1212 = vmatprep.subr.mxu0 0.0
    %1213 = vmatpush1.msra.mxu0 0.0
    %1214 = vmatprep.mubr.f32.mxu0 0.0
    %1215 = vmatmul.mubr.f32.gmra.mrb[0].mxu0 %v1145
    %v1216 = vpop.f32.mrb[0].mxu0
    %v1217 = vadd.f32 0.0, %v1216
    %v1218 = vpop.f32.mrb[0].mxu0
    %1219 = vmatprep.mubr.f32.mxu0 0.0
    %1220 = vmatmul.mubr.f32.gmra.mrb[0].mxu0 %v1148
    %v1221 = vpop.f32.mrb[0].mxu0
    %v1222 = vadd.f32 0.0, %v1221
    %v1223 = vpop.f32.mrb[0].mxu0
    %1224 = vdwg.mxu0
    %v1225 = vrcp.pop %v1134
    %v1226 = vrcp.pop %v1137
    %v1227 = vmul.f32 %v1217, %v1225
    %v1228 = vmul.f32 %v1222, %v1226
    %v1230 = vsel %vm188, %v1227, 0
    %v1233 = vsel %vm188, %v1228, 0
    %1235 = vmatprep.subr.mxu0 0.0
    %1236 = vmatpush1.msra.mxu0 %v181
    %1237 = vmatprep.subr.mxu0 0.0
    %1238 = vmatpush1.msra.mxu0 0.0
    %1239 = vmatprep.subr.mxu0 0.0
    %1240 = vmatpush1.msra.mxu0 0.0
    %1241 = vmatprep.subr.mxu0 0.0
    %1242 = vmatpush1.msra.mxu0 0.0
    %1243 = vmatprep.subr.mxu0 0.0
    %1244 = vmatpush1.msra.mxu0 0.0
    %1245 = vmatprep.subr.mxu0 0.0
    %1246 = vmatpush1.msra.mxu0 0.0
    %1247 = vmatprep.subr.mxu0 0.0
    %1248 = vmatpush1.msra.mxu0 0.0
    %1249 = vmatprep.subr.mxu0 0.0
    %1250 = vmatpush1.msra.mxu0 0.0
    %1251 = vmatprep.subr.mxu0 0.0
    %1252 = vmatpush1.msra.mxu0 0.0
    %1253 = vmatprep.subr.mxu0 0.0
    %1254 = vmatpush1.msra.mxu0 0.0
    %1255 = vmatprep.subr.mxu0 0.0
    %1256 = vmatpush1.msra.mxu0 0.0
    %1257 = vmatprep.subr.mxu0 0.0
    %1258 = vmatpush1.msra.mxu0 0.0
    %1259 = vmatprep.subr.mxu0 0.0
    %1260 = vmatpush1.msra.mxu0 0.0
    %1261 = vmatprep.subr.mxu0 0.0
    %1262 = vmatpush1.msra.mxu0 0.0
    %1263 = vmatprep.subr.mxu0 0.0
    %1264 = vmatpush1.msra.mxu0 0.0
    %1265 = vmatprep.subr.mxu0 0.0
    %1266 = vmatpush1.msra.mxu0 0.0
    %1267 = vmatprep.subr.mxu0 0.0
    %1268 = vmatpush1.msra.mxu0 0.0
    %1269 = vmatprep.subr.mxu0 0.0
    %1270 = vmatpush1.msra.mxu0 0.0
    %1271 = vmatprep.subr.mxu0 0.0
    %1272 = vmatpush1.msra.mxu0 0.0
    %1273 = vmatprep.subr.mxu0 0.0
    %1274 = vmatpush1.msra.mxu0 0.0
    %1275 = vmatprep.subr.mxu0 0.0
    %1276 = vmatpush1.msra.mxu0 0.0
    %1277 = vmatprep.subr.mxu0 0.0
    %1278 = vmatpush1.msra.mxu0 0.0
    %1279 = vmatprep.subr.mxu0 0.0
    %1280 = vmatpush1.msra.mxu0 0.0
    %1281 = vmatprep.subr.mxu0 0.0
    %1282 = vmatpush1.msra.mxu0 0.0
    %1283 = vmatprep.subr.mxu0 0.0
    %1284 = vmatpush1.msra.mxu0 0.0
    %1285 = vmatprep.subr.mxu0 0.0
    %1286 = vmatpush1.msra.mxu0 0.0
    %1287 = vmatprep.subr.mxu0 0.0
    %1288 = vmatpush1.msra.mxu0 0.0
    %1289 = vmatprep.subr.mxu0 0.0
    %1290 = vmatpush1.msra.mxu0 0.0
    %1291 = vmatprep.subr.mxu0 0.0
    %1292 = vmatpush1.msra.mxu0 0.0
    %1293 = vmatprep.subr.mxu0 0.0
    %1294 = vmatpush1.msra.mxu0 0.0
    %1295 = vmatprep.subr.mxu0 0.0
    %1296 = vmatpush1.msra.mxu0 0.0
    %1297 = vmatprep.subr.mxu0 0.0
    %1298 = vmatpush1.msra.mxu0 0.0
    %1299 = vmatprep.mubr.f32.mxu0 0.0
    %1300 = vmatmul.mubr.f32.gmra.mrb[0].mxu0 %v1230
    %v1301 = vpop.f32.mrb[0].mxu0
    %v1302 = vadd.f32 0.0, %v1301
    %v1303 = vpop.f32.mrb[0].mxu0
    %1304 = vmatprep.mubr.f32.mxu0 0.0
    %1305 = vmatmul.mubr.f32.gmra.mrb[0].mxu0 %v1233
    %v1306 = vpop.f32.mrb[0].mxu0
    %v1307 = vadd.f32 0.0, %v1306
    %v1308 = vpop.f32.mrb[0].mxu0
    %1309 = vdwg.mxu0
    %v1310 = vadd.f32 %v1027, %v1302
    %v1311 = vadd.f32 %v1028, %v1307
    %v1312 = vlaneseq
    %v1313 = vshrl.u32 %v1312, 7
    %v1314 = vsub.s32 1, %v1313
    %v1315 = vrot.slane %v40, %v1314
    %v1316 = vadd.f32 %v1310, %v1315
    %v1317 = vadd.f32 %v1311, %v1315
    %v1318 = vadd.f32 %v38, %v1316
    %v1319 = vadd.f32 %v39, %v1317
    %v1320 = vsel %vm49, %v1318, 0.0
    %1321 = vadd.xlane.f32.xlu0 %v1320
    %v1322 = vpop.xlane.xlu0 %1321
    %v1323 = vsel %vm49, %v1319, 0.0
    %1324 = vadd.xlane.f32.xlu0 %v1323
    %v1325 = vpop.xlane.xlu0 %1324
    %v1326 = vrcp.pop 32.0
    %v1327 = vmul.f32 %v1322, %v1326
    %v1328 = vmul.f32 %v1325, %v1326
    %v1329 = vsub.f32 %v1318, %v1327
    %v1330 = vsub.f32 %v1319, %v1328
    %v1331 = vmul.f32 %v1329, %v1329
    %v1332 = vmul.f32 %v1330, %v1330
    %v1333 = vsel %vm49, %v1331, 0.0
    %1334 = vadd.xlane.f32.xlu0 %v1333
    %v1335 = vpop.xlane.xlu0 %1334
    %v1336 = vsel %vm49, %v1332, 0.0
    %1337 = vadd.xlane.f32.xlu0 %v1336
    %v1338 = vpop.xlane.xlu0 %1337
    %v1339 = vmul.f32 %v1335, %v1326
    %v1340 = vmul.f32 %v1338, %v1326
    %v1341 = vadd.f32 %v1339, 1e-05
    %v1342 = vadd.f32 %v1340, 1e-05
    %v1343 = vrsqrt.pop %v1341
    %v1344 = vrsqrt.pop %v1342
    %v1345 = vmul.f32 %v1329, %v1343
    %v1346 = vmul.f32 %v1330, %v1344
    %v1347 = vlaneseq
    %v1348 = vshrl.u32 %v1347, 7
    %v1349 = vsub.s32 4, %v1348
    %v1350 = vrot.slane %v40, %v1349
    %v1351 = vmul.f32 %v1345, %v1350
    %v1352 = vmul.f32 %v1346, %v1350
    %v1353 = vlaneseq
    %v1354 = vshrl.u32 %v1353, 7
    %v1355 = vsub.s32 5, %v1354
    %v1356 = vrot.slane %v40, %v1355
    %v1357 = vadd.f32 %v1351, %v1356
    %v1358 = vadd.f32 %v1352, %v1356
    %v1359 = vld [vmem:[%s3] sm:$0xff]
    %v1360 = vld [vmem:[%s3 + $0x8] sm:$0xff]
    %v1361 = vld [vmem:[%s3 + $0x10] sm:$0xff]
    %v1362 = vld [vmem:[%s3 + $0x18] sm:$0xff]
    %v1363 = vlaneseq
    %v1364 = vshrl.u32 %v1363, 7
    %v1365 = vsub.s32 2, %v1364
    %v1366 = vrot.slane %v40, %v1365
    %v1368 = vsel %vm49, %v1357, 0
    %v1371 = vsel %vm49, %v1358, 0
    %1373 = vmatprep.subr.mxu0 0.0
    %1374 = vmatpush1.msra.mxu0 %v1359
    %1375 = vmatprep.subr.mxu0 0.0
    %1376 = vmatpush1.msra.mxu0 %v1360
    %1377 = vmatprep.subr.mxu0 0.0
    %1378 = vmatpush1.msra.mxu0 %v1361
    %1379 = vmatprep.subr.mxu0 0.0
    %1380 = vmatpush1.msra.mxu0 %v1362
    %1381 = vmatprep.subr.mxu0 0.0
    %1382 = vmatpush1.msra.mxu0 0.0
    %1383 = vmatprep.subr.mxu0 0.0
    %1384 = vmatpush1.msra.mxu0 0.0
    %1385 = vmatprep.subr.mxu0 0.0
    %1386 = vmatpush1.msra.mxu0 0.0
    %1387 = vmatprep.subr.mxu0 0.0
    %1388 = vmatpush1.msra.mxu0 0.0
    %1389 = vmatprep.subr.mxu0 0.0
    %1390 = vmatpush1.msra.mxu0 0.0
    %1391 = vmatprep.subr.mxu0 0.0
    %1392 = vmatpush1.msra.mxu0 0.0
    %1393 = vmatprep.subr.mxu0 0.0
    %1394 = vmatpush1.msra.mxu0 0.0
    %1395 = vmatprep.subr.mxu0 0.0
    %1396 = vmatpush1.msra.mxu0 0.0
    %1397 = vmatprep.subr.mxu0 0.0
    %1398 = vmatpush1.msra.mxu0 0.0
    %1399 = vmatprep.subr.mxu0 0.0
    %1400 = vmatpush1.msra.mxu0 0.0
    %1401 = vmatprep.subr.mxu0 0.0
    %1402 = vmatpush1.msra.mxu0 0.0
    %1403 = vmatprep.subr.mxu0 0.0
    %1404 = vmatpush1.msra.mxu0 0.0
    %1405 = vmatprep.subr.mxu0 0.0
    %1406 = vmatpush1.msra.mxu0 0.0
    %1407 = vmatprep.subr.mxu0 0.0
    %1408 = vmatpush1.msra.mxu0 0.0
    %1409 = vmatprep.subr.mxu0 0.0
    %1410 = vmatpush1.msra.mxu0 0.0
    %1411 = vmatprep.subr.mxu0 0.0
    %1412 = vmatpush1.msra.mxu0 0.0
    %1413 = vmatprep.subr.mxu0 0.0
    %1414 = vmatpush1.msra.mxu0 0.0
    %1415 = vmatprep.subr.mxu0 0.0
    %1416 = vmatpush1.msra.mxu0 0.0
    %1417 = vmatprep.subr.mxu0 0.0
    %1418 = vmatpush1.msra.mxu0 0.0
    %1419 = vmatprep.subr.mxu0 0.0
    %1420 = vmatpush1.msra.mxu0 0.0
    %1421 = vmatprep.subr.mxu0 0.0
    %1422 = vmatpush1.msra.mxu0 0.0
    %1423 = vmatprep.subr.mxu0 0.0
    %1424 = vmatpush1.msra.mxu0 0.0
    %1425 = vmatprep.subr.mxu0 0.0
    %1426 = vmatpush1.msra.mxu0 0.0
    %1427 = vmatprep.subr.mxu0 0.0
    %1428 = vmatpush1.msra.mxu0 0.0
    %1429 = vmatprep.subr.mxu0 0.0
    %1430 = vmatpush1.msra.mxu0 0.0
    %1431 = vmatprep.subr.mxu0 0.0
    %1432 = vmatpush1.msra.mxu0 0.0
    %1433 = vmatprep.subr.mxu0 0.0
    %1434 = vmatpush1.msra.mxu0 0.0
    %1435 = vmatprep.subr.mxu0 0.0
    %1436 = vmatpush1.msra.mxu0 0.0
    %1437 = vmatprep.mubr.f32.mxu0 0.0
    %1438 = vmatmul.mubr.f32.gmra.mrb[0].mxu0 %v1368
    %v1439 = vpop.f32.mrb[0].mxu0
    %v1440 = vadd.f32 %v1366, %v1439
    %v1441 = vpop.f32.mrb[0].mxu0
    %1442 = vmatprep.mubr.f32.mxu0 0.0
    %1443 = vmatmul.mubr.f32.gmra.mrb[0].mxu0 %v1371
    %v1444 = vpop.f32.mrb[0].mxu0
    %v1445 = vadd.f32 %v1366, %v1444
    %v1446 = vpop.f32.mrb[0].mxu0
    %1447 = vdwg.mxu0
    %v1448 = vmax.f32 %v1440, 0.0
    %v1449 = vmax.f32 %v1445, 0.0
    %v1450 = vld [vmem:[%s4] sm:$0xff]
    %v1451 = vld [vmem:[%s4 + $0x8] sm:$0xff]
    %v1452 = vld [vmem:[%s4 + $0x10] sm:$0xff]
    %v1453 = vld [vmem:[%s4 + $0x18] sm:$0xff]
    %v1454 = vld [vmem:[%s4 + $0x20] sm:$0xff]
    %v1455 = vld [vmem:[%s4 + $0x28] sm:$0xff]
    %v1456 = vld [vmem:[%s4 + $0x30] sm:$0xff]
    %v1457 = vld [vmem:[%s4 + $0x38] sm:$0xff]
    %v1458 = vlaneseq
    %v1459 = vshrl.u32 %v1458, 7
    %v1460 = vsub.s32 3, %v1459
    %v1461 = vrot.slane %v40, %v1460
    %vm1462 = vcmask 523264
    %v1464 = vsel %vm1462, %v1448, 0
    %v1467 = vsel %vm1462, %v1449, 0
    %1469 = vmatprep.subr.mxu0 0.0
    %1470 = vmatpush1.msra.mxu0 %v1450
    %1471 = vmatprep.subr.mxu0 0.0
    %1472 = vmatpush1.msra.mxu0 %v1451
    %1473 = vmatprep.subr.mxu0 0.0
    %1474 = vmatpush1.msra.mxu0 %v1452
    %1475 = vmatprep.subr.mxu0 0.0
    %1476 = vmatpush1.msra.mxu0 %v1453
    %1477 = vmatprep.subr.mxu0 0.0
    %1478 = vmatpush1.msra.mxu0 %v1454
    %1479 = vmatprep.subr.mxu0 0.0
    %1480 = vmatpush1.msra.mxu0 %v1455
    %1481 = vmatprep.subr.mxu0 0.0
    %1482 = vmatpush1.msra.mxu0 %v1456
    %1483 = vmatprep.subr.mxu0 0.0
    %1484 = vmatpush1.msra.mxu0 %v1457
    %1485 = vmatprep.subr.mxu0 0.0
    %1486 = vmatpush1.msra.mxu0 0.0
    %1487 = vmatprep.subr.mxu0 0.0
    %1488 = vmatpush1.msra.mxu0 0.0
    %1489 = vmatprep.subr.mxu0 0.0
    %1490 = vmatpush1.msra.mxu0 0.0
    %1491 = vmatprep.subr.mxu0 0.0
    %1492 = vmatpush1.msra.mxu0 0.0
    %1493 = vmatprep.subr.mxu0 0.0
    %1494 = vmatpush1.msra.mxu0 0.0
    %1495 = vmatprep.subr.mxu0 0.0
    %1496 = vmatpush1.msra.mxu0 0.0
    %1497 = vmatprep.subr.mxu0 0.0
    %1498 = vmatpush1.msra.mxu0 0.0
    %1499 = vmatprep.subr.mxu0 0.0
    %1500 = vmatpush1.msra.mxu0 0.0
    %1501 = vmatprep.subr.mxu0 0.0
    %1502 = vmatpush1.msra.mxu0 0.0
    %1503 = vmatprep.subr.mxu0 0.0
    %1504 = vmatpush1.msra.mxu0 0.0
    %1505 = vmatprep.subr.mxu0 0.0
    %1506 = vmatpush1.msra.mxu0 0.0
    %1507 = vmatprep.subr.mxu0 0.0
    %1508 = vmatpush1.msra.mxu0 0.0
    %1509 = vmatprep.subr.mxu0 0.0
    %1510 = vmatpush1.msra.mxu0 0.0
    %1511 = vmatprep.subr.mxu0 0.0
    %1512 = vmatpush1.msra.mxu0 0.0
    %1513 = vmatprep.subr.mxu0 0.0
    %1514 = vmatpush1.msra.mxu0 0.0
    %1515 = vmatprep.subr.mxu0 0.0
    %1516 = vmatpush1.msra.mxu0 0.0
    %1517 = vmatprep.subr.mxu0 0.0
    %1518 = vmatpush1.msra.mxu0 0.0
    %1519 = vmatprep.subr.mxu0 0.0
    %1520 = vmatpush1.msra.mxu0 0.0
    %1521 = vmatprep.subr.mxu0 0.0
    %1522 = vmatpush1.msra.mxu0 0.0
    %1523 = vmatprep.subr.mxu0 0.0
    %1524 = vmatpush1.msra.mxu0 0.0
    %1525 = vmatprep.subr.mxu0 0.0
    %1526 = vmatpush1.msra.mxu0 0.0
    %1527 = vmatprep.subr.mxu0 0.0
    %1528 = vmatpush1.msra.mxu0 0.0
    %1529 = vmatprep.subr.mxu0 0.0
    %1530 = vmatpush1.msra.mxu0 0.0
    %1531 = vmatprep.subr.mxu0 0.0
    %1532 = vmatpush1.msra.mxu0 0.0
    %1533 = vmatprep.mubr.f32.mxu0 0.0
    %1534 = vmatmul.mubr.f32.gmra.mrb[0].mxu0 %v1464
    %v1535 = vpop.f32.mrb[0].mxu0
    %v1536 = vadd.f32 %v1461, %v1535
    %v1537 = vpop.f32.mrb[0].mxu0
    %1538 = vmatprep.mubr.f32.mxu0 0.0
    %1539 = vmatmul.mubr.f32.gmra.mrb[0].mxu0 %v1467
    %v1540 = vpop.f32.mrb[0].mxu0
    %v1541 = vadd.f32 %v1461, %v1540
    %v1542 = vpop.f32.mrb[0].mxu0
    %1543 = vdwg.mxu0
    %v1544 = vadd.f32 %v1357, %v1536
    %v1545 = vadd.f32 %v1358, %v1541
    %v1546 = vsel %vm49, %v1544, 0.0
    %1547 = vadd.xlane.f32.xlu0 %v1546
    %v1548 = vpop.xlane.xlu0 %1547
    %v1549 = vsel %vm49, %v1545, 0.0
    %1550 = vadd.xlane.f32.xlu0 %v1549
    %v1551 = vpop.xlane.xlu0 %1550
    %v1552 = vmul.f32 %v1548, %v1326
    %v1553 = vmul.f32 %v1551, %v1326
    %v1554 = vsub.f32 %v1544, %v1552
    %v1555 = vsub.f32 %v1545, %v1553
    %v1556 = vmul.f32 %v1554, %v1554
    %v1557 = vmul.f32 %v1555, %v1555
    %v1558 = vsel %vm49, %v1556, 0.0
    %1559 = vadd.xlane.f32.xlu0 %v1558
    %v1560 = vpop.xlane.xlu0 %1559
    %v1561 = vsel %vm49, %v1557, 0.0
    %1562 = vadd.xlane.f32.xlu0 %v1561
    %v1563 = vpop.xlane.xlu0 %1562
    %v1564 = vmul.f32 %v1560, %v1326
    %v1565 = vmul.f32 %v1563, %v1326
    %v1566 = vadd.f32 %v1564, 1e-05
    %v1567 = vadd.f32 %v1565, 1e-05
    %v1568 = vrsqrt.pop %v1566
    %v1569 = vrsqrt.pop %v1567
    %v1570 = vmul.f32 %v1554, %v1568
    %v1571 = vmul.f32 %v1555, %v1569
    %v1572 = vlaneseq
    %v1573 = vshrl.u32 %v1572, 7
    %v1574 = vsub.s32 6, %v1573
    %v1575 = vrot.slane %v40, %v1574
    %v1576 = vmul.f32 %v1570, %v1575
    %v1577 = vmul.f32 %v1571, %v1575
    %v1578 = vlaneseq
    %v1579 = vshrl.u32 %v1578, 7
    %v1580 = vsub.s32 7, %v1579
    %v1581 = vrot.slane %v40, %v1580
    %v1582 = vadd.f32 %v1576, %v1581
    %v1583 = vadd.f32 %v1577, %v1581
    %1584 = vst.msk [vmem:[#allocation5] sm:$0xff] %vm49, %v1582
    %1585 = vst.msk [vmem:[#allocation5 + $0x8] sm:$0xff] %vm49, %v1583
    // Predicated region
    $region30: #{encoder_layer.1} parent=1 // pred_check
      _
    $region31: #{encoder_layer.1} parent=1 // pred_check_branch
      %1587 = sbr.rel (0) target = $region33
    $region32: #{encoder_layer.1} parent=1 // pred_region
      %s1589 = ssub.s32 256, 256
      %1590 = vsyncadd [#allocation4], %s1589
      %s1591 = sshll.u32 [#allocation5], 4
      %s1592 = int_to_ptr.vmem [resolvable:$true] %s1591
      %1597 = dma.vmem_to_hbm [thread:$0]  %s1592, 256, %s6, [#allocation4], 128, 128, 8
    $region33: #{encoder_layer.1} parent=1 // pred_fallthru
      _
    // Predicated region
    $region34: #{encoder_layer.1} parent=1 // pred_check
      _
    $region35: #{encoder_layer.1} parent=1 // pred_check_branch
      %1599 = sbr.rel (0) target = $region37
    $region36: #{encoder_layer.1} parent=1 // pred_region
      %1600 = dma.done [#allocation4], 256
    $region37: #{encoder_layer.1} parent=1 // pred_fallthru
      _
    %1601 = vsyncpa [#allocation3], 1
    %1602 = vsyncpa [#allocation4], 1

</llo_original>
